<compile_context>
chip_gen: v6e
topology: v6e:2x2x1
jax: 0.10.0
libtpu: 0.0.40
codegen_flags: <defaults>
</compile_context>

<pallas_src>
import jax
import jax.numpy as jnp
from jax.experimental import pallas as pl
from jax.experimental.pallas import tpu as pltpu


def _round_up(n, m):
    return ((n + m - 1) // m) * m


def extendnn_kernel(x_ref,
                    w1a_ref, b1a_ref, w1b_ref, b1b_ref,
                    w2a_ref, b2a_ref, w2b_ref, b2b_ref,
                    wo_ref, bo_ref,
                    out_ref):
    """One batch tile: 2 Inception blocks + output head; all operands native f32."""
    def mm(v, w_ref):
        return jnp.dot(v, w_ref[...], preferred_element_type=jnp.float32)

    x = x_ref[...]                                            # (TB, n_in) f32

    # Inception block 1: relu(Linear(n_mid,n_in)(relu(Linear(n_in,n_mid)(x))) + x)
    h = jnp.maximum(mm(x, w1a_ref) + b1a_ref[...], 0.0)       # (TB, n_mid)
    x = jnp.maximum(mm(h, w1b_ref) + b1b_ref[...] + x, 0.0)   # (TB, n_in)

    # Inception block 2
    h = jnp.maximum(mm(x, w2a_ref) + b2a_ref[...], 0.0)
    x = jnp.maximum(mm(h, w2b_ref) + b2b_ref[...] + x, 0.0)

    # Output head: (TB, n_in) @ (n_in, 2) + (1, 2) -> native 2-wide writeback.
    out_ref[...] = (mm(x, wo_ref) + bo_ref[...]).astype(out_ref.dtype)


def _choose_batch_tile(B, tb_max):
    """Pick (TB, B_pad): TB multiple of 8, >= 2 grid steps when possible (v7x megacore),
    bounded zero-row padding, and a tb_max cap for pipelining granularity."""
    B8 = _round_up(max(B, 1), 8)
    num_tiles = pl.cdiv(B8, tb_max)
    if num_tiles == 1 and B8 > 8:
        num_tiles = 2                      # let both v7x TensorCores get a step
    TB = min(B8, _round_up(pl.cdiv(B8, num_tiles), 8))
    B_pad = _round_up(B8, TB)
    return TB, B_pad


def extendnn_forward(x, params, *, tb_max=2048, single_buffer_weights=True):
    """x: (B, n_in) float32; params: [(W, b)] * 5 in kernel order (W: (in, out), b: (1, out))."""
    (w1a, b1a), (w1b, b1b), (w2a, b2a), (w2b, b2b), (wo, bo) = params
    x = jnp.asarray(x, jnp.float32)
    B, n_in = x.shape
    n_out = wo.shape[1]

    consts = [jnp.asarray(a, jnp.float32)
              for a in (w1a, b1a, w1b, b1b, w2a, b2a, w2b, b2b, wo, bo)]

    TB, B_pad = _choose_batch_tile(B, tb_max)
    grid = (B_pad // TB,)

    # Row-only batch padding (no lane padding of x/out in HBM). Zero rows are exact
    # pass-throughs of the math and are sliced off below.
    x_p = x if B_pad == B else jnp.pad(x, ((0, B_pad - B), (0, 0)))

    x_spec = pl.BlockSpec((TB, n_in), lambda i: (i, 0))
    out_spec = pl.BlockSpec((TB, n_out), lambda i: (i, 0))

    def const_spec(shape, single_buffer):
        # Constant block index -> VMEM-resident across all grid steps; single-buffer
        # it (default is 2-deep) since its block never changes.
        if single_buffer:
            return pl.BlockSpec(shape, lambda i: (0, 0),
                                pipeline_mode=pl.Buffered(1))
        return pl.BlockSpec(shape, lambda i: (0, 0))

    def run(single_buffer):
        out = pl.pallas_call(
            extendnn_kernel,
            out_shape=jax.ShapeDtypeStruct((B_pad, n_out), jnp.float32),
            grid=grid,
            in_specs=[x_spec] + [const_spec(a.shape, single_buffer) for a in consts],
            out_specs=out_spec,
            compiler_params=pltpu.CompilerParams(
                dimension_semantics=("parallel",)),   # megacore split on v7x
        )(x_p, *consts)
        return jax.block_until_ready(out)

    if single_buffer_weights:
        try:
            out_padded = run(True)
        except Exception:
            # pipeline_mode=pl.Buffered(1) not supported on this jax build; default
            # double-buffered constant specs are functionally identical (tiny VMEM cost).
            out_padded = run(False)
    else:
        out_padded = run(False)

    return out_padded if B_pad == B else out_padded[:B]


def init_params(key, n_in, n_mid):
    """Deterministic synthetic weights; Linear stored as (in, out) + bias (1, out)."""
    def lin(k, fan_in, fan_out):
        kw, kb = jax.random.split(k)
        bound = 1.0 / jnp.sqrt(fan_in)
        w = jax.random.uniform(kw, (fan_in, fan_out), jnp.float32, -bound, bound)
        b = jax.random.uniform(kb, (1, fan_out), jnp.float32, -bound, bound)
        return w, b

    keys = jax.random.split(key, 5)
    return [
        lin(keys[0], n_in, n_mid),   # inception 1, Linear(n_in, n_mid)
        lin(keys[1], n_mid, n_in),   # inception 1, Linear(n_mid, n_in)
        lin(keys[2], n_in, n_mid),   # inception 2, Linear(n_in, n_mid)
        lin(keys[3], n_mid, n_in),   # inception 2, Linear(n_mid, n_in)
        lin(keys[4], n_in, 2),       # output head, Linear(n_in, 2)
    ]


def extendnn_reference(x, params):
    (w1a, b1a), (w1b, b1b), (w2a, b2a), (w2b, b2b), (wo, bo) = params
    h = jax.nn.relu(x @ w1a + b1a)
    x = jax.nn.relu(h @ w1b + b1b + x)
    h = jax.nn.relu(x @ w2a + b2a)
    x = jax.nn.relu(h @ w2b + b2b + x)
    return x @ wo + bo


if __name__ == "__main__":
    B, n_in, n_mid = 13, 32, 64   # B=13 exercises row padding + >1 grid step (TB=8)

    key = jax.random.PRNGKey(0)
    kx, kp = jax.random.split(key)
    x = jax.random.normal(kx, (B, n_in), jnp.float32)
    params = init_params(kp, n_in, n_mid)

    out = extendnn_forward(x, params)
    out = jax.block_until_ready(out)

    ref = extendnn_reference(x, params)
    assert out.shape == (B, 2), out.shape
    # All-f32 data path; tolerance covers the TPU MXU's default-precision matmul passes.
    assert jnp.allclose(out, ref, atol=2e-2, rtol=2e-2), (
        f"max abs diff {jnp.max(jnp.abs(out - ref))}")

    print("KERNEL_OK")
</pallas_src>

<mosaic_0001>
module attributes {stable_mosaic.version = 11 : i64} {
  func.func @extendnn_kernel(%arg0: i32, %arg1: memref<8x32xf32, #tpu.memory_space<vmem>>, %arg2: memref<32x64xf32, #tpu.memory_space<vmem>>, %arg3: memref<1x64xf32, #tpu.memory_space<vmem>>, %arg4: memref<64x32xf32, #tpu.memory_space<vmem>>, %arg5: memref<1x32xf32, #tpu.memory_space<vmem>>, %arg6: memref<32x64xf32, #tpu.memory_space<vmem>>, %arg7: memref<1x64xf32, #tpu.memory_space<vmem>>, %arg8: memref<64x32xf32, #tpu.memory_space<vmem>>, %arg9: memref<1x32xf32, #tpu.memory_space<vmem>>, %arg10: memref<32x2xf32, #tpu.memory_space<vmem>>, %arg11: memref<1x2xf32, #tpu.memory_space<vmem>>, %arg12: memref<8x2xf32, #tpu.memory_space<vmem>>) attributes {dimension_semantics = [#tpu.dimension_semantics<parallel>], iteration_bounds = array<i64: 2>, scalar_prefetch = 0 : i64, scratch_operands = 0 : i64, tpu.core_type = #tpu.core_type<tc>, window_params = [{transform_indices = @transform_0, window_bounds = array<i64: 8, 32>}, {pipeline_mode = #tpu.pipeline_mode<synchronous>, transform_indices = @transform_1, window_bounds = array<i64: 32, 64>}, {pipeline_mode = #tpu.pipeline_mode<synchronous>, transform_indices = @transform_2, window_bounds = array<i64: 1, 64>}, {pipeline_mode = #tpu.pipeline_mode<synchronous>, transform_indices = @transform_3, window_bounds = array<i64: 64, 32>}, {pipeline_mode = #tpu.pipeline_mode<synchronous>, transform_indices = @transform_4, window_bounds = array<i64: 1, 32>}, {pipeline_mode = #tpu.pipeline_mode<synchronous>, transform_indices = @transform_5, window_bounds = array<i64: 32, 64>}, {pipeline_mode = #tpu.pipeline_mode<synchronous>, transform_indices = @transform_6, window_bounds = array<i64: 1, 64>}, {pipeline_mode = #tpu.pipeline_mode<synchronous>, transform_indices = @transform_7, window_bounds = array<i64: 64, 32>}, {pipeline_mode = #tpu.pipeline_mode<synchronous>, transform_indices = @transform_8, window_bounds = array<i64: 1, 32>}, {pipeline_mode = #tpu.pipeline_mode<synchronous>, transform_indices = @transform_9, window_bounds = array<i64: 32, 2>}, {pipeline_mode = #tpu.pipeline_mode<synchronous>, transform_indices = @transform_10, window_bounds = array<i64: 1, 2>}, {transform_indices = @transform_11, window_bounds = array<i64: 8, 2>}]} {
    %c0 = arith.constant 0 : index
    %c0_0 = arith.constant 0 : index
    %0 = vector.load %arg1[%c0, %c0_0] : memref<8x32xf32, #tpu.memory_space<vmem>>, vector<8x32xf32>
    %c0_1 = arith.constant 0 : index
    %c0_2 = arith.constant 0 : index
    %1 = vector.load %arg2[%c0_1, %c0_2] : memref<32x64xf32, #tpu.memory_space<vmem>>, vector<32x64xf32>
    %cst = arith.constant dense<0.000000e+00> : vector<8x64xf32>
    %2 = tpu.matmul %0, %1, %cst {dimension_numbers = #tpu.dot_dimension_numbers<[1], [0], [0], [1], [0, 0, 1, 1], [], []>} : vector<8x32xf32>, vector<32x64xf32>, vector<8x64xf32> -> vector<8x64xf32>
    %c0_3 = arith.constant 0 : index
    %c0_4 = arith.constant 0 : index
    %3 = vector.load %arg3[%c0_3, %c0_4] : memref<1x64xf32, #tpu.memory_space<vmem>>, vector<1x64xf32>
    %4 = vector.broadcast %3 : vector<1x64xf32> to vector<8x64xf32>
    %5 = arith.addf %2, %4 : vector<8x64xf32>
    %cst_5 = arith.constant 0.000000e+00 : f32
    %6 = vector.broadcast %cst_5 : f32 to vector<8x64xf32>
    %7 = arith.maximumf %5, %6 : vector<8x64xf32>
    %c0_6 = arith.constant 0 : index
    %c0_7 = arith.constant 0 : index
    %8 = vector.load %arg4[%c0_6, %c0_7] : memref<64x32xf32, #tpu.memory_space<vmem>>, vector<64x32xf32>
    %cst_8 = arith.constant dense<0.000000e+00> : vector<8x32xf32>
    %9 = tpu.matmul %7, %8, %cst_8 {dimension_numbers = #tpu.dot_dimension_numbers<[1], [0], [0], [1], [0, 0, 1, 1], [], []>} : vector<8x64xf32>, vector<64x32xf32>, vector<8x32xf32> -> vector<8x32xf32>
    %c0_9 = arith.constant 0 : index
    %c0_10 = arith.constant 0 : index
    %10 = vector.load %arg5[%c0_9, %c0_10] : memref<1x32xf32, #tpu.memory_space<vmem>>, vector<1x32xf32>
    %11 = vector.broadcast %10 : vector<1x32xf32> to vector<8x32xf32>
    %12 = arith.addf %9, %11 : vector<8x32xf32>
    %13 = arith.addf %12, %0 : vector<8x32xf32>
    %cst_11 = arith.constant 0.000000e+00 : f32
    %14 = vector.broadcast %cst_11 : f32 to vector<8x32xf32>
    %15 = arith.maximumf %13, %14 : vector<8x32xf32>
    %c0_12 = arith.constant 0 : index
    %c0_13 = arith.constant 0 : index
    %16 = vector.load %arg6[%c0_12, %c0_13] : memref<32x64xf32, #tpu.memory_space<vmem>>, vector<32x64xf32>
    %cst_14 = arith.constant dense<0.000000e+00> : vector<8x64xf32>
    %17 = tpu.matmul %15, %16, %cst_14 {dimension_numbers = #tpu.dot_dimension_numbers<[1], [0], [0], [1], [0, 0, 1, 1], [], []>} : vector<8x32xf32>, vector<32x64xf32>, vector<8x64xf32> -> vector<8x64xf32>
    %c0_15 = arith.constant 0 : index
    %c0_16 = arith.constant 0 : index
    %18 = vector.load %arg7[%c0_15, %c0_16] : memref<1x64xf32, #tpu.memory_space<vmem>>, vector<1x64xf32>
    %19 = vector.broadcast %18 : vector<1x64xf32> to vector<8x64xf32>
    %20 = arith.addf %17, %19 : vector<8x64xf32>
    %cst_17 = arith.constant 0.000000e+00 : f32
    %21 = vector.broadcast %cst_17 : f32 to vector<8x64xf32>
    %22 = arith.maximumf %20, %21 : vector<8x64xf32>
    %c0_18 = arith.constant 0 : index
    %c0_19 = arith.constant 0 : index
    %23 = vector.load %arg8[%c0_18, %c0_19] : memref<64x32xf32, #tpu.memory_space<vmem>>, vector<64x32xf32>
    %cst_20 = arith.constant dense<0.000000e+00> : vector<8x32xf32>
    %24 = tpu.matmul %22, %23, %cst_20 {dimension_numbers = #tpu.dot_dimension_numbers<[1], [0], [0], [1], [0, 0, 1, 1], [], []>} : vector<8x64xf32>, vector<64x32xf32>, vector<8x32xf32> -> vector<8x32xf32>
    %c0_21 = arith.constant 0 : index
    %c0_22 = arith.constant 0 : index
    %25 = vector.load %arg9[%c0_21, %c0_22] : memref<1x32xf32, #tpu.memory_space<vmem>>, vector<1x32xf32>
    %26 = vector.broadcast %25 : vector<1x32xf32> to vector<8x32xf32>
    %27 = arith.addf %24, %26 : vector<8x32xf32>
    %28 = arith.addf %27, %15 : vector<8x32xf32>
    %cst_23 = arith.constant 0.000000e+00 : f32
    %29 = vector.broadcast %cst_23 : f32 to vector<8x32xf32>
    %30 = arith.maximumf %28, %29 : vector<8x32xf32>
    %c0_24 = arith.constant 0 : index
    %c0_25 = arith.constant 0 : index
    %31 = vector.load %arg10[%c0_24, %c0_25] : memref<32x2xf32, #tpu.memory_space<vmem>>, vector<32x2xf32>
    %cst_26 = arith.constant dense<0.000000e+00> : vector<8x2xf32>
    %32 = tpu.matmul %30, %31, %cst_26 {dimension_numbers = #tpu.dot_dimension_numbers<[1], [0], [0], [1], [0, 0, 1, 1], [], []>} : vector<8x32xf32>, vector<32x2xf32>, vector<8x2xf32> -> vector<8x2xf32>
    %c0_27 = arith.constant 0 : index
    %c0_28 = arith.constant 0 : index
    %33 = vector.load %arg11[%c0_27, %c0_28] : memref<1x2xf32, #tpu.memory_space<vmem>>, vector<1x2xf32>
    %34 = vector.broadcast %33 : vector<1x2xf32> to vector<8x2xf32>
    %35 = arith.addf %32, %34 : vector<8x2xf32>
    %c0_29 = arith.constant 0 : index
    %c0_30 = arith.constant 0 : index
    %36 = vector.load %arg12[%c0_29, %c0_30] : memref<8x2xf32, #tpu.memory_space<vmem>>, vector<8x2xf32>
    tpu.vector_store %arg12[%c0_29, %c0_30], %35 {strides = array<i32>} : memref<8x2xf32, #tpu.memory_space<vmem>>, vector<8x2xf32>,
    return
  }
  func.func @transform_0(%arg0: i32) -> (i32, i32) {
    %c0_i32 = arith.constant 0 : i32
    %c0_i32_0 = arith.constant 0 : i32
    return %arg0, %c0_i32 : i32, i32
  }
  func.func @transform_1(%arg0: i32) -> (i32, i32) {
    %c0_i32 = arith.constant 0 : i32
    %c0_i32_0 = arith.constant 0 : i32
    %c0_i32_1 = arith.constant 0 : i32
    return %c0_i32, %c0_i32_0 : i32, i32
  }
  func.func @transform_2(%arg0: i32) -> (i32, i32) {
    %c0_i32 = arith.constant 0 : i32
    %c0_i32_0 = arith.constant 0 : i32
    %c0_i32_1 = arith.constant 0 : i32
    return %c0_i32, %c0_i32_0 : i32, i32
  }
  func.func @transform_3(%arg0: i32) -> (i32, i32) {
    %c0_i32 = arith.constant 0 : i32
    %c0_i32_0 = arith.constant 0 : i32
    %c0_i32_1 = arith.constant 0 : i32
    return %c0_i32, %c0_i32_0 : i32, i32
  }
  func.func @transform_4(%arg0: i32) -> (i32, i32) {
    %c0_i32 = arith.constant 0 : i32
    %c0_i32_0 = arith.constant 0 : i32
    %c0_i32_1 = arith.constant 0 : i32
    return %c0_i32, %c0_i32_0 : i32, i32
  }
  func.func @transform_5(%arg0: i32) -> (i32, i32) {
    %c0_i32 = arith.constant 0 : i32
    %c0_i32_0 = arith.constant 0 : i32
    %c0_i32_1 = arith.constant 0 : i32
    return %c0_i32, %c0_i32_0 : i32, i32
  }
  func.func @transform_6(%arg0: i32) -> (i32, i32) {
    %c0_i32 = arith.constant 0 : i32
    %c0_i32_0 = arith.constant 0 : i32
    %c0_i32_1 = arith.constant 0 : i32
    return %c0_i32, %c0_i32_0 : i32, i32
  }
  func.func @transform_7(%arg0: i32) -> (i32, i32) {
    %c0_i32 = arith.constant 0 : i32
    %c0_i32_0 = arith.constant 0 : i32
    %c0_i32_1 = arith.constant 0 : i32
    return %c0_i32, %c0_i32_0 : i32, i32
  }
  func.func @transform_8(%arg0: i32) -> (i32, i32) {
    %c0_i32 = arith.constant 0 : i32
    %c0_i32_0 = arith.constant 0 : i32
    %c0_i32_1 = arith.constant 0 : i32
    return %c0_i32, %c0_i32_0 : i32, i32
  }
  func.func @transform_9(%arg0: i32) -> (i32, i32) {
    %c0_i32 = arith.constant 0 : i32
    %c0_i32_0 = arith.constant 0 : i32
    %c0_i32_1 = arith.constant 0 : i32
    return %c0_i32, %c0_i32_0 : i32, i32
  }
  func.func @transform_10(%arg0: i32) -> (i32, i32) {
    %c0_i32 = arith.constant 0 : i32
    %c0_i32_0 = arith.constant 0 : i32
    %c0_i32_1 = arith.constant 0 : i32
    return %c0_i32, %c0_i32_0 : i32, i32
  }
  func.func @transform_11(%arg0: i32) -> (i32, i32) {
    %c0_i32 = arith.constant 0 : i32
    %c0_i32_0 = arith.constant 0 : i32
    return %arg0, %c0_i32 : i32, i32
  }
}

module attributes {stable_mosaic.version = 11 : i64} {
  func.func @extendnn_kernel(%arg0: i32, %arg1: memref<8x32xf32, #tpu.memory_space<vmem>>, %arg2: memref<32x64xf32, #tpu.memory_space<vmem>>, %arg3: memref<1x64xf32, #tpu.memory_space<vmem>>, %arg4: memref<64x32xf32, #tpu.memory_space<vmem>>, %arg5: memref<1x32xf32, #tpu.memory_space<vmem>>, %arg6: memref<32x64xf32, #tpu.memory_space<vmem>>, %arg7: memref<1x64xf32, #tpu.memory_space<vmem>>, %arg8: memref<64x32xf32, #tpu.memory_space<vmem>>, %arg9: memref<1x32xf32, #tpu.memory_space<vmem>>, %arg10: memref<32x2xf32, #tpu.memory_space<vmem>>, %arg11: memref<1x2xf32, #tpu.memory_space<vmem>>, %arg12: memref<8x2xf32, #tpu.memory_space<vmem>>) attributes {dimension_semantics = [#tpu.dimension_semantics<parallel>], iteration_bounds = array<i64: 2>, scalar_prefetch = 0 : i64, scratch_operands = 0 : i64, tpu.core_type = #tpu.core_type<tc>, window_params = [{transform_indices = @transform_0, window_bounds = array<i64: 8, 32>}, {pipeline_mode = #tpu.pipeline_mode<synchronous>, transform_indices = @transform_1, window_bounds = array<i64: 32, 64>}, {pipeline_mode = #tpu.pipeline_mode<synchronous>, transform_indices = @transform_2, window_bounds = array<i64: 1, 64>}, {pipeline_mode = #tpu.pipeline_mode<synchronous>, transform_indices = @transform_3, window_bounds = array<i64: 64, 32>}, {pipeline_mode = #tpu.pipeline_mode<synchronous>, transform_indices = @transform_4, window_bounds = array<i64: 1, 32>}, {pipeline_mode = #tpu.pipeline_mode<synchronous>, transform_indices = @transform_5, window_bounds = array<i64: 32, 64>}, {pipeline_mode = #tpu.pipeline_mode<synchronous>, transform_indices = @transform_6, window_bounds = array<i64: 1, 64>}, {pipeline_mode = #tpu.pipeline_mode<synchronous>, transform_indices = @transform_7, window_bounds = array<i64: 64, 32>}, {pipeline_mode = #tpu.pipeline_mode<synchronous>, transform_indices = @transform_8, window_bounds = array<i64: 1, 32>}, {pipeline_mode = #tpu.pipeline_mode<synchronous>, transform_indices = @transform_9, window_bounds = array<i64: 32, 2>}, {pipeline_mode = #tpu.pipeline_mode<synchronous>, transform_indices = @transform_10, window_bounds = array<i64: 1, 2>}, {transform_indices = @transform_11, window_bounds = array<i64: 8, 2>}]} {
    %c0 = arith.constant 0 : index
    %c0_0 = arith.constant 0 : index
    %0 = vector.load %arg1[%c0, %c0_0] : memref<8x32xf32, #tpu.memory_space<vmem>>, vector<8x32xf32>
    %c0_1 = arith.constant 0 : index
    %c0_2 = arith.constant 0 : index
    %1 = vector.load %arg2[%c0_1, %c0_2] : memref<32x64xf32, #tpu.memory_space<vmem>>, vector<32x64xf32>
    %cst = arith.constant dense<0.000000e+00> : vector<8x64xf32>
    %2 = tpu.matmul %0, %1, %cst {dimension_numbers = #tpu.dot_dimension_numbers<[1], [0], [0], [1], [0, 0, 1, 1], [], []>} : vector<8x32xf32>, vector<32x64xf32>, vector<8x64xf32> -> vector<8x64xf32>
    %c0_3 = arith.constant 0 : index
    %c0_4 = arith.constant 0 : index
    %3 = vector.load %arg3[%c0_3, %c0_4] : memref<1x64xf32, #tpu.memory_space<vmem>>, vector<1x64xf32>
    %4 = vector.broadcast %3 : vector<1x64xf32> to vector<8x64xf32>
    %5 = arith.addf %2, %4 : vector<8x64xf32>
    %cst_5 = arith.constant 0.000000e+00 : f32
    %6 = vector.broadcast %cst_5 : f32 to vector<8x64xf32>
    %7 = arith.maximumf %5, %6 : vector<8x64xf32>
    %c0_6 = arith.constant 0 : index
    %c0_7 = arith.constant 0 : index
    %8 = vector.load %arg4[%c0_6, %c0_7] : memref<64x32xf32, #tpu.memory_space<vmem>>, vector<64x32xf32>
    %cst_8 = arith.constant dense<0.000000e+00> : vector<8x32xf32>
    %9 = tpu.matmul %7, %8, %cst_8 {dimension_numbers = #tpu.dot_dimension_numbers<[1], [0], [0], [1], [0, 0, 1, 1], [], []>} : vector<8x64xf32>, vector<64x32xf32>, vector<8x32xf32> -> vector<8x32xf32>
    %c0_9 = arith.constant 0 : index
    %c0_10 = arith.constant 0 : index
    %10 = vector.load %arg5[%c0_9, %c0_10] : memref<1x32xf32, #tpu.memory_space<vmem>>, vector<1x32xf32>
    %11 = vector.broadcast %10 : vector<1x32xf32> to vector<8x32xf32>
    %12 = arith.addf %9, %11 : vector<8x32xf32>
    %13 = arith.addf %12, %0 : vector<8x32xf32>
    %cst_11 = arith.constant 0.000000e+00 : f32
    %14 = vector.broadcast %cst_11 : f32 to vector<8x32xf32>
    %15 = arith.maximumf %13, %14 : vector<8x32xf32>
    %c0_12 = arith.constant 0 : index
    %c0_13 = arith.constant 0 : index
    %16 = vector.load %arg6[%c0_12, %c0_13] : memref<32x64xf32, #tpu.memory_space<vmem>>, vector<32x64xf32>
    %cst_14 = arith.constant dense<0.000000e+00> : vector<8x64xf32>
    %17 = tpu.matmul %15, %16, %cst_14 {dimension_numbers = #tpu.dot_dimension_numbers<[1], [0], [0], [1], [0, 0, 1, 1], [], []>} : vector<8x32xf32>, vector<32x64xf32>, vector<8x64xf32> -> vector<8x64xf32>
    %c0_15 = arith.constant 0 : index
    %c0_16 = arith.constant 0 : index
    %18 = vector.load %arg7[%c0_15, %c0_16] : memref<1x64xf32, #tpu.memory_space<vmem>>, vector<1x64xf32>
    %19 = vector.broadcast %18 : vector<1x64xf32> to vector<8x64xf32>
    %20 = arith.addf %17, %19 : vector<8x64xf32>
    %cst_17 = arith.constant 0.000000e+00 : f32
    %21 = vector.broadcast %cst_17 : f32 to vector<8x64xf32>
    %22 = arith.maximumf %20, %21 : vector<8x64xf32>
    %c0_18 = arith.constant 0 : index
    %c0_19 = arith.constant 0 : index
    %23 = vector.load %arg8[%c0_18, %c0_19] : memref<64x32xf32, #tpu.memory_space<vmem>>, vector<64x32xf32>
    %cst_20 = arith.constant dense<0.000000e+00> : vector<8x32xf32>
    %24 = tpu.matmul %22, %23, %cst_20 {dimension_numbers = #tpu.dot_dimension_numbers<[1], [0], [0], [1], [0, 0, 1, 1], [], []>} : vector<8x64xf32>, vector<64x32xf32>, vector<8x32xf32> -> vector<8x32xf32>
    %c0_21 = arith.constant 0 : index
    %c0_22 = arith.constant 0 : index
    %25 = vector.load %arg9[%c0_21, %c0_22] : memref<1x32xf32, #tpu.memory_space<vmem>>, vector<1x32xf32>
    %26 = vector.broadcast %25 : vector<1x32xf32> to vector<8x32xf32>
    %27 = arith.addf %24, %26 : vector<8x32xf32>
    %28 = arith.addf %27, %15 : vector<8x32xf32>
    %cst_23 = arith.constant 0.000000e+00 : f32
    %29 = vector.broadcast %cst_23 : f32 to vector<8x32xf32>
    %30 = arith.maximumf %28, %29 : vector<8x32xf32>
    %c0_24 = arith.constant 0 : index
    %c0_25 = arith.constant 0 : index
    %31 = vector.load %arg10[%c0_24, %c0_25] : memref<32x2xf32, #tpu.memory_space<vmem>>, vector<32x2xf32>
    %cst_26 = arith.constant dense<0.000000e+00> : vector<8x2xf32>
    %32 = tpu.matmul %30, %31, %cst_26 {dimension_numbers = #tpu.dot_dimension_numbers<[1], [0], [0], [1], [0, 0, 1, 1], [], []>} : vector<8x32xf32>, vector<32x2xf32>, vector<8x2xf32> -> vector<8x2xf32>
    %c0_27 = arith.constant 0 : index
    %c0_28 = arith.constant 0 : index
    %33 = vector.load %arg11[%c0_27, %c0_28] : memref<1x2xf32, #tpu.memory_space<vmem>>, vector<1x2xf32>
    %34 = vector.broadcast %33 : vector<1x2xf32> to vector<8x2xf32>
    %35 = arith.addf %32, %34 : vector<8x2xf32>
    %c0_29 = arith.constant 0 : index
    %c0_30 = arith.constant 0 : index
    %36 = vector.load %arg12[%c0_29, %c0_30] : memref<8x2xf32, #tpu.memory_space<vmem>>, vector<8x2xf32>
    tpu.vector_store %arg12[%c0_29, %c0_30], %35 {strides = array<i32>} : memref<8x2xf32, #tpu.memory_space<vmem>>, vector<8x2xf32>,
    return
  }
  func.func @transform_0(%arg0: i32) -> (i32, i32) {
    %c0_i32 = arith.constant 0 : i32
    %c0_i32_0 = arith.constant 0 : i32
    return %arg0, %c0_i32 : i32, i32
  }
  func.func @transform_1(%arg0: i32) -> (i32, i32) {
    %c0_i32 = arith.constant 0 : i32
    %c0_i32_0 = arith.constant 0 : i32
    %c0_i32_1 = arith.constant 0 : i32
    return %c0_i32, %c0_i32_0 : i32, i32
  }
  func.func @transform_2(%arg0: i32) -> (i32, i32) {
    %c0_i32 = arith.constant 0 : i32
    %c0_i32_0 = arith.constant 0 : i32
    %c0_i32_1 = arith.constant 0 : i32
    return %c0_i32, %c0_i32_0 : i32, i32
  }
  func.func @transform_3(%arg0: i32) -> (i32, i32) {
    %c0_i32 = arith.constant 0 : i32
    %c0_i32_0 = arith.constant 0 : i32
    %c0_i32_1 = arith.constant 0 : i32
    return %c0_i32, %c0_i32_0 : i32, i32
  }
  func.func @transform_4(%arg0: i32) -> (i32, i32) {
    %c0_i32 = arith.constant 0 : i32
    %c0_i32_0 = arith.constant 0 : i32
    %c0_i32_1 = arith.constant 0 : i32
    return %c0_i32, %c0_i32_0 : i32, i32
  }
  func.func @transform_5(%arg0: i32) -> (i32, i32) {
    %c0_i32 = arith.constant 0 : i32
    %c0_i32_0 = arith.constant 0 : i32
    %c0_i32_1 = arith.constant 0 : i32
    return %c0_i32, %c0_i32_0 : i32, i32
  }
  func.func @transform_6(%arg0: i32) -> (i32, i32) {
    %c0_i32 = arith.constant 0 : i32
    %c0_i32_0 = arith.constant 0 : i32
    %c0_i32_1 = arith.constant 0 : i32
    return %c0_i32, %c0_i32_0 : i32, i32
  }
  func.func @transform_7(%arg0: i32) -> (i32, i32) {
    %c0_i32 = arith.constant 0 : i32
    %c0_i32_0 = arith.constant 0 : i32
    %c0_i32_1 = arith.constant 0 : i32
    return %c0_i32, %c0_i32_0 : i32, i32
  }
  func.func @transform_8(%arg0: i32) -> (i32, i32) {
    %c0_i32 = arith.constant 0 : i32
    %c0_i32_0 = arith.constant 0 : i32
    %c0_i32_1 = arith.constant 0 : i32
    return %c0_i32, %c0_i32_0 : i32, i32
  }
  func.func @transform_9(%arg0: i32) -> (i32, i32) {
    %c0_i32 = arith.constant 0 : i32
    %c0_i32_0 = arith.constant 0 : i32
    %c0_i32_1 = arith.constant 0 : i32
    return %c0_i32, %c0_i32_0 : i32, i32
  }
  func.func @transform_10(%arg0: i32) -> (i32, i32) {
    %c0_i32 = arith.constant 0 : i32
    %c0_i32_0 = arith.constant 0 : i32
    %c0_i32_1 = arith.constant 0 : i32
    return %c0_i32, %c0_i32_0 : i32, i32
  }
  func.func @transform_11(%arg0: i32) -> (i32, i32) {
    %c0_i32 = arith.constant 0 : i32
    %c0_i32_0 = arith.constant 0 : i32
    return %arg0, %c0_i32 : i32, i32
  }
}

</mosaic_0001>

<llo_original>
// kernel: tpu_custom_call.1
$region0: #{tpu_custom_call.1}
  #allocation0 [shape = 'u32[]', space=smem, size = 0x4, offset = 0x4, fixed_abs, tag = 'smem constant byte address 0x4 - core index']
  #allocation1 [shape = 'u32[144,128]{1,0:T(1,128)}', space=vmem, size = 0x12000, scoped, tag = 'internal scratch']
  %s0 = inlined_call_operand.vmem [shape: f32[16,32], index: 0, kind: input, shape index: {}]
  %s1 = inlined_call_operand.vmem [shape: f32[32,64], index: 1, kind: input, shape index: {}]
  %s2 = inlined_call_operand.vmem [shape: f32[1,64], index: 2, kind: input, shape index: {}]
  %s3 = inlined_call_operand.vmem [shape: f32[64,32], index: 3, kind: input, shape index: {}]
  %s4 = inlined_call_operand.vmem [shape: f32[1,32], index: 4, kind: input, shape index: {}]
  %s5 = inlined_call_operand.vmem [shape: f32[32,64], index: 5, kind: input, shape index: {}]
  %s6 = inlined_call_operand.vmem [shape: f32[1,64], index: 6, kind: input, shape index: {}]
  %s7 = inlined_call_operand.vmem [shape: f32[64,32], index: 7, kind: input, shape index: {}]
  %s8 = inlined_call_operand.vmem [shape: f32[1,32], index: 8, kind: input, shape index: {}]
  %s9 = inlined_call_operand.vmem [shape: f32[32,2], index: 9, kind: input, shape index: {}]
  %s10 = inlined_call_operand.vmem [shape: f32[1,2], index: 10, kind: input, shape index: {}]
  %s11 = inlined_call_operand.vmem [shape: f32[16,2], index: 11, kind: output, shape index: {}]
  %s12 = sld [smem:[#allocation0]]
  $region77: #{tpu_custom_call.1} parent=0
    _
  %s14 = ssub.s32 1, %s12
  %s15 = scalar_select 0, %s14, %s12
  loop: start=0, step=1, limit=4
  $region2: #{tpu_custom_call.1} parent=0 // loop_pre_header
    _
  $region3: #{tpu_custom_call.1} parent=0 // loop_header
    %s17 = sphi 0, %s21
    %p18 = scmp.ge.s32.totalorder %s17, 4
    %s27 = sphi 0, %s29
    %s30 = sphi 0, %s27
    %s31 = sphi 0, %s30
    %s47 = sphi 0, %s31
    %s51 = sphi 0, %s51
    %s53 = sphi 0, %s51
    %s54 = sphi 0, %s53
    %s68 = sphi 0, %s54
    %s72 = sphi 0, %s72
    %s74 = sphi 0, %s72
    %s75 = sphi 0, %s74
    %s89 = sphi 0, %s75
    %s93 = sphi 0, %s93
    %s95 = sphi 0, %s93
    %s96 = sphi 0, %s95
    %s110 = sphi 0, %s96
    %s114 = sphi 0, %s114
    %s116 = sphi 0, %s114
    %s117 = sphi 0, %s116
    %s131 = sphi 0, %s117
    %s135 = sphi 0, %s135
    %s137 = sphi 0, %s135
    %s138 = sphi 0, %s137
    %s152 = sphi 0, %s138
    %s156 = sphi 0, %s156
    %s158 = sphi 0, %s156
    %s159 = sphi 0, %s158
    %s173 = sphi 0, %s159
    %s177 = sphi 0, %s177
    %s179 = sphi 0, %s177
    %s180 = sphi 0, %s179
    %s194 = sphi 0, %s180
    %s198 = sphi 0, %s198
    %s200 = sphi 0, %s198
    %s201 = sphi 0, %s200
    %s215 = sphi 0, %s201
    %s219 = sphi 0, %s219
    %s221 = sphi 0, %s219
    %s222 = sphi 0, %s221
    %s236 = sphi 0, %s222
    %s240 = sphi 0, %s240
    %s242 = sphi 0, %s240
    %s243 = sphi 0, %s242
    %s257 = sphi 0, %s243
    %s263 = sphi 0, %s265
    %s266 = sphi 0, %s263
    %s267 = sphi 0, %s266
    %s283 = sphi 0, %s267
  $region4: #{tpu_custom_call.1} parent=0 // loop_header_branch
    %20 = sbr.rel (%p18) target = $region8
  $region5: #{tpu_custom_call.1} parent=0 // loop_body
    %s22 = ssub.s32 %s17, 1
    %s23 = ssub.s32 %s17, 2
    %s24 = sadd.s32 %s17, 1
    %s25 = ssub.s32 %s17, %s24
    %p26 = scmp.eq.s32.totalorder %s25, 0
    %s28 = sadd.s32 %s27, 1
    %s29 = scalar_select %p26, %s27, %s28
    %p32 = pneg %p26
    %p33 = scmp.eq.s32.totalorder %s17, 1
    %p34 = por %p32, %p33
    %p35 = scmp.ne.s32.totalorder %s27, %s30
    %p36 = scmp.eq.s32.totalorder %s17, 0
    %p37 = por %p35, %p36
    %p38 = scmp.ne.s32.totalorder %s27, %s30
    %p39 = scmp.eq.s32.totalorder %s22, 1
    %p40 = por %p38, %p39
    %p41 = scmp.ne.s32.totalorder %s30, %s31
    %p42 = scmp.eq.s32.totalorder %s22, 0
    %p43 = por %p41, %p42
    %p44 = scmp.ne.s32.totalorder %s30, %s31
    %p45 = scmp.eq.s32.totalorder %s23, 1
    %p46 = por %p44, %p45
    %p48 = scmp.ne.s32.totalorder %s31, %s47
    %p49 = scmp.eq.s32.totalorder %s23, 0
    %p50 = por %p48, %p49
    %s52 = sadd.s32 %s51, 1
    %p55 = scmp.eq.s32.totalorder %s17, 1
    %p56 = scmp.ne.s32.totalorder %s51, %s53
    %p57 = scmp.eq.s32.totalorder %s17, 0
    %p58 = por %p56, %p57
    %p59 = scmp.ne.s32.totalorder %s51, %s53
    %p60 = scmp.eq.s32.totalorder %s22, 1
    %p61 = por %p59, %p60
    %p62 = scmp.ne.s32.totalorder %s53, %s54
    %p63 = scmp.eq.s32.totalorder %s22, 0
    %p64 = por %p62, %p63
    %p65 = scmp.ne.s32.totalorder %s53, %s54
    %p66 = scmp.eq.s32.totalorder %s23, 1
    %p67 = por %p65, %p66
    %p69 = scmp.ne.s32.totalorder %s54, %s68
    %p70 = scmp.eq.s32.totalorder %s23, 0
    %p71 = por %p69, %p70
    %s73 = sadd.s32 %s72, 1
    %p76 = scmp.eq.s32.totalorder %s17, 1
    %p77 = scmp.ne.s32.totalorder %s72, %s74
    %p78 = scmp.eq.s32.totalorder %s17, 0
    %p79 = por %p77, %p78
    %p80 = scmp.ne.s32.totalorder %s72, %s74
    %p81 = scmp.eq.s32.totalorder %s22, 1
    %p82 = por %p80, %p81
    %p83 = scmp.ne.s32.totalorder %s74, %s75
    %p84 = scmp.eq.s32.totalorder %s22, 0
    %p85 = por %p83, %p84
    %p86 = scmp.ne.s32.totalorder %s74, %s75
    %p87 = scmp.eq.s32.totalorder %s23, 1
    %p88 = por %p86, %p87
    %p90 = scmp.ne.s32.totalorder %s75, %s89
    %p91 = scmp.eq.s32.totalorder %s23, 0
    %p92 = por %p90, %p91
    %s94 = sadd.s32 %s93, 1
    %p97 = scmp.eq.s32.totalorder %s17, 1
    %p98 = scmp.ne.s32.totalorder %s93, %s95
    %p99 = scmp.eq.s32.totalorder %s17, 0
    %p100 = por %p98, %p99
    %p101 = scmp.ne.s32.totalorder %s93, %s95
    %p102 = scmp.eq.s32.totalorder %s22, 1
    %p103 = por %p101, %p102
    %p104 = scmp.ne.s32.totalorder %s95, %s96
    %p105 = scmp.eq.s32.totalorder %s22, 0
    %p106 = por %p104, %p105
    %p107 = scmp.ne.s32.totalorder %s95, %s96
    %p108 = scmp.eq.s32.totalorder %s23, 1
    %p109 = por %p107, %p108
    %p111 = scmp.ne.s32.totalorder %s96, %s110
    %p112 = scmp.eq.s32.totalorder %s23, 0
    %p113 = por %p111, %p112
    %s115 = sadd.s32 %s114, 1
    %p118 = scmp.eq.s32.totalorder %s17, 1
    %p119 = scmp.ne.s32.totalorder %s114, %s116
    %p120 = scmp.eq.s32.totalorder %s17, 0
    %p121 = por %p119, %p120
    %p122 = scmp.ne.s32.totalorder %s114, %s116
    %p123 = scmp.eq.s32.totalorder %s22, 1
    %p124 = por %p122, %p123
    %p125 = scmp.ne.s32.totalorder %s116, %s117
    %p126 = scmp.eq.s32.totalorder %s22, 0
    %p127 = por %p125, %p126
    %p128 = scmp.ne.s32.totalorder %s116, %s117
    %p129 = scmp.eq.s32.totalorder %s23, 1
    %p130 = por %p128, %p129
    %p132 = scmp.ne.s32.totalorder %s117, %s131
    %p133 = scmp.eq.s32.totalorder %s23, 0
    %p134 = por %p132, %p133
    %s136 = sadd.s32 %s135, 1
    %p139 = scmp.eq.s32.totalorder %s17, 1
    %p140 = scmp.ne.s32.totalorder %s135, %s137
    %p141 = scmp.eq.s32.totalorder %s17, 0
    %p142 = por %p140, %p141
    %p143 = scmp.ne.s32.totalorder %s135, %s137
    %p144 = scmp.eq.s32.totalorder %s22, 1
    %p145 = por %p143, %p144
    %p146 = scmp.ne.s32.totalorder %s137, %s138
    %p147 = scmp.eq.s32.totalorder %s22, 0
    %p148 = por %p146, %p147
    %p149 = scmp.ne.s32.totalorder %s137, %s138
    %p150 = scmp.eq.s32.totalorder %s23, 1
    %p151 = por %p149, %p150
    %p153 = scmp.ne.s32.totalorder %s138, %s152
    %p154 = scmp.eq.s32.totalorder %s23, 0
    %p155 = por %p153, %p154
    %s157 = sadd.s32 %s156, 1
    %p160 = scmp.eq.s32.totalorder %s17, 1
    %p161 = scmp.ne.s32.totalorder %s156, %s158
    %p162 = scmp.eq.s32.totalorder %s17, 0
    %p163 = por %p161, %p162
    %p164 = scmp.ne.s32.totalorder %s156, %s158
    %p165 = scmp.eq.s32.totalorder %s22, 1
    %p166 = por %p164, %p165
    %p167 = scmp.ne.s32.totalorder %s158, %s159
    %p168 = scmp.eq.s32.totalorder %s22, 0
    %p169 = por %p167, %p168
    %p170 = scmp.ne.s32.totalorder %s158, %s159
    %p171 = scmp.eq.s32.totalorder %s23, 1
    %p172 = por %p170, %p171
    %p174 = scmp.ne.s32.totalorder %s159, %s173
    %p175 = scmp.eq.s32.totalorder %s23, 0
    %p176 = por %p174, %p175
    %s178 = sadd.s32 %s177, 1
    %p181 = scmp.eq.s32.totalorder %s17, 1
    %p182 = scmp.ne.s32.totalorder %s177, %s179
    %p183 = scmp.eq.s32.totalorder %s17, 0
    %p184 = por %p182, %p183
    %p185 = scmp.ne.s32.totalorder %s177, %s179
    %p186 = scmp.eq.s32.totalorder %s22, 1
    %p187 = por %p185, %p186
    %p188 = scmp.ne.s32.totalorder %s179, %s180
    %p189 = scmp.eq.s32.totalorder %s22, 0
    %p190 = por %p188, %p189
    %p191 = scmp.ne.s32.totalorder %s179, %s180
    %p192 = scmp.eq.s32.totalorder %s23, 1
    %p193 = por %p191, %p192
    %p195 = scmp.ne.s32.totalorder %s180, %s194
    %p196 = scmp.eq.s32.totalorder %s23, 0
    %p197 = por %p195, %p196
    %s199 = sadd.s32 %s198, 1
    %p202 = scmp.eq.s32.totalorder %s17, 1
    %p203 = scmp.ne.s32.totalorder %s198, %s200
    %p204 = scmp.eq.s32.totalorder %s17, 0
    %p205 = por %p203, %p204
    %p206 = scmp.ne.s32.totalorder %s198, %s200
    %p207 = scmp.eq.s32.totalorder %s22, 1
    %p208 = por %p206, %p207
    %p209 = scmp.ne.s32.totalorder %s200, %s201
    %p210 = scmp.eq.s32.totalorder %s22, 0
    %p211 = por %p209, %p210
    %p212 = scmp.ne.s32.totalorder %s200, %s201
    %p213 = scmp.eq.s32.totalorder %s23, 1
    %p214 = por %p212, %p213
    %p216 = scmp.ne.s32.totalorder %s201, %s215
    %p217 = scmp.eq.s32.totalorder %s23, 0
    %p218 = por %p216, %p217
    %s220 = sadd.s32 %s219, 1
    %p223 = scmp.eq.s32.totalorder %s17, 1
    %p224 = scmp.ne.s32.totalorder %s219, %s221
    %p225 = scmp.eq.s32.totalorder %s17, 0
    %p226 = por %p224, %p225
    %p227 = scmp.ne.s32.totalorder %s219, %s221
    %p228 = scmp.eq.s32.totalorder %s22, 1
    %p229 = por %p227, %p228
    %p230 = scmp.ne.s32.totalorder %s221, %s222
    %p231 = scmp.eq.s32.totalorder %s22, 0
    %p232 = por %p230, %p231
    %p233 = scmp.ne.s32.totalorder %s221, %s222
    %p234 = scmp.eq.s32.totalorder %s23, 1
    %p235 = por %p233, %p234
    %p237 = scmp.ne.s32.totalorder %s222, %s236
    %p238 = scmp.eq.s32.totalorder %s23, 0
    %p239 = por %p237, %p238
    %s241 = sadd.s32 %s240, 1
    %p244 = scmp.eq.s32.totalorder %s17, 1
    %p245 = scmp.ne.s32.totalorder %s240, %s242
    %p246 = scmp.eq.s32.totalorder %s17, 0
    %p247 = por %p245, %p246
    %p248 = scmp.ne.s32.totalorder %s240, %s242
    %p249 = scmp.eq.s32.totalorder %s22, 1
    %p250 = por %p248, %p249
    %p251 = scmp.ne.s32.totalorder %s242, %s243
    %p252 = scmp.eq.s32.totalorder %s22, 0
    %p253 = por %p251, %p252
    %p254 = scmp.ne.s32.totalorder %s242, %s243
    %p255 = scmp.eq.s32.totalorder %s23, 1
    %p256 = por %p254, %p255
    %p258 = scmp.ne.s32.totalorder %s243, %s257
    %p259 = scmp.eq.s32.totalorder %s23, 0
    %p260 = por %p258, %p259
    %s261 = ssub.s32 %s17, %s24
    %p262 = scmp.eq.s32.totalorder %s261, 0
    %s264 = sadd.s32 %s263, 1
    %s265 = scalar_select %p262, %s263, %s264
    %p268 = pneg %p262
    %p269 = scmp.eq.s32.totalorder %s17, 1
    %p270 = por %p268, %p269
    %p271 = scmp.ne.s32.totalorder %s263, %s266
    %p272 = scmp.eq.s32.totalorder %s17, 0
    %p273 = por %p271, %p272
    %p274 = scmp.ne.s32.totalorder %s263, %s266
    %p275 = scmp.eq.s32.totalorder %s22, 1
    %p276 = por %p274, %p275
    %p277 = scmp.ne.s32.totalorder %s266, %s267
    %p278 = scmp.eq.s32.totalorder %s22, 0
    %p279 = por %p277, %p278
    %p280 = scmp.ne.s32.totalorder %s266, %s267
    %p281 = scmp.eq.s32.totalorder %s23, 1
    %p282 = por %p280, %p281
    %p284 = scmp.ne.s32.totalorder %s267, %s283
    %p285 = scmp.eq.s32.totalorder %s23, 0
    %p286 = por %p284, %p285
    %p287 = scmp.le.s32.totalorder 1, %s17
    %p288 = scmp.lt.s32.totalorder %s17, 3
    %p289 = pnand %p287, %p288
    %p290 = pneg %p289
    // Predicated region
    $region9: #{tpu_custom_call.1} parent=5 // pred_check
      _
    $region10: #{tpu_custom_call.1} parent=5 // pred_check_branch
      %292 = sbr.rel (%p289) target = $region12
    $region11: #{tpu_custom_call.1} parent=5 // pred_region
      %s293 = ssub.s32 %s17, 1
      // Predicated region
      $region13: #{tpu_custom_call.1} parent=11 // pred_check
        %p294 = pneg %p64
      $region14: #{tpu_custom_call.1} parent=11 // pred_check_branch
        %296 = sbr.rel (%p294) target = $region16
      $region15: #{tpu_custom_call.1} parent=11 // pred_region
        _
      $region16: #{tpu_custom_call.1} parent=11 // pred_fallthru
        _
      // Predicated region
      $region17: #{tpu_custom_call.1} parent=11 // pred_check
        %p297 = pneg %p85
      $region18: #{tpu_custom_call.1} parent=11 // pred_check_branch
        %299 = sbr.rel (%p297) target = $region20
      $region19: #{tpu_custom_call.1} parent=11 // pred_region
        _
      $region20: #{tpu_custom_call.1} parent=11 // pred_fallthru
        _
      // Predicated region
      $region21: #{tpu_custom_call.1} parent=11 // pred_check
        %p300 = pneg %p106
      $region22: #{tpu_custom_call.1} parent=11 // pred_check_branch
        %302 = sbr.rel (%p300) target = $region24
      $region23: #{tpu_custom_call.1} parent=11 // pred_region
        _
      $region24: #{tpu_custom_call.1} parent=11 // pred_fallthru
        _
      // Predicated region
      $region25: #{tpu_custom_call.1} parent=11 // pred_check
        %p303 = pneg %p127
      $region26: #{tpu_custom_call.1} parent=11 // pred_check_branch
        %305 = sbr.rel (%p303) target = $region28
      $region27: #{tpu_custom_call.1} parent=11 // pred_region
        _
      $region28: #{tpu_custom_call.1} parent=11 // pred_fallthru
        _
      // Predicated region
      $region29: #{tpu_custom_call.1} parent=11 // pred_check
        %p306 = pneg %p148
      $region30: #{tpu_custom_call.1} parent=11 // pred_check_branch
        %308 = sbr.rel (%p306) target = $region32
      $region31: #{tpu_custom_call.1} parent=11 // pred_region
        _
      $region32: #{tpu_custom_call.1} parent=11 // pred_fallthru
        _
      // Predicated region
      $region33: #{tpu_custom_call.1} parent=11 // pred_check
        %p309 = pneg %p169
      $region34: #{tpu_custom_call.1} parent=11 // pred_check_branch
        %311 = sbr.rel (%p309) target = $region36
      $region35: #{tpu_custom_call.1} parent=11 // pred_region
        _
      $region36: #{tpu_custom_call.1} parent=11 // pred_fallthru
        _
      // Predicated region
      $region37: #{tpu_custom_call.1} parent=11 // pred_check
        %p312 = pneg %p190
      $region38: #{tpu_custom_call.1} parent=11 // pred_check_branch
        %314 = sbr.rel (%p312) target = $region40
      $region39: #{tpu_custom_call.1} parent=11 // pred_region
        _
      $region40: #{tpu_custom_call.1} parent=11 // pred_fallthru
        _
      // Predicated region
      $region41: #{tpu_custom_call.1} parent=11 // pred_check
        %p315 = pneg %p211
      $region42: #{tpu_custom_call.1} parent=11 // pred_check_branch
        %317 = sbr.rel (%p315) target = $region44
      $region43: #{tpu_custom_call.1} parent=11 // pred_region
        _
      $region44: #{tpu_custom_call.1} parent=11 // pred_fallthru
        _
      // Predicated region
      $region45: #{tpu_custom_call.1} parent=11 // pred_check
        %p318 = pneg %p232
      $region46: #{tpu_custom_call.1} parent=11 // pred_check_branch
        %320 = sbr.rel (%p318) target = $region48
      $region47: #{tpu_custom_call.1} parent=11 // pred_region
        _
      $region48: #{tpu_custom_call.1} parent=11 // pred_fallthru
        _
      // Predicated region
      $region49: #{tpu_custom_call.1} parent=11 // pred_check
        %p321 = pneg %p253
      $region50: #{tpu_custom_call.1} parent=11 // pred_check_branch
        %323 = sbr.rel (%p321) target = $region52
      $region51: #{tpu_custom_call.1} parent=11 // pred_region
        _
      $region52: #{tpu_custom_call.1} parent=11 // pred_fallthru
        _
    $region12: #{tpu_custom_call.1} parent=5 // pred_fallthru
      _
    %p324 = scmp.lt.s32.totalorder %s17, 2
    // Predicated region
    $region53: #{tpu_custom_call.1} parent=5 // pred_check
      %p325 = pneg %p324
    $region54: #{tpu_custom_call.1} parent=5 // pred_check_branch
      %327 = sbr.rel (%p325) target = $region56
    $region55: #{tpu_custom_call.1} parent=5 // pred_region
      // Predicated region
      $region57: #{tpu_custom_call.1} parent=55 // pred_check
        %p328 = pneg %p37
      $region58: #{tpu_custom_call.1} parent=55 // pred_check_branch
        %330 = sbr.rel (%p328) target = $region60
      $region59: #{tpu_custom_call.1} parent=55 // pred_region
        %p331 = scmp.lt.s32.totalorder %s17, 1
        %s332 = scalar_select %p331, %s17, 1
        %s333 = smul.addr %s332, 8
        %s334 = scalar_lea.vmem %s0, %s333
      $region60: #{tpu_custom_call.1} parent=55 // pred_fallthru
        _
    $region56: #{tpu_custom_call.1} parent=5 // pred_fallthru
      _
    %p335 = scmp.le.s32.totalorder 1, %s17
    %p336 = scmp.lt.s32.totalorder %s17, 3
    %p337 = pnand %p335, %p336
    %p338 = pneg %p337
    // Predicated region
    $region61: #{tpu_custom_call.1} parent=5 // pred_check
      _
    $region62: #{tpu_custom_call.1} parent=5 // pred_check_branch
      %340 = sbr.rel (%p337) target = $region64
    $region63: #{tpu_custom_call.1} parent=5 // pred_region
      %s341 = ssub.s32 %s17, 1
      %p342 = scmp.lt.s32.totalorder %s22, 1
      %s343 = scalar_select %p342, %s22, 1
      %s344 = smul.addr %s343, 8
      %s345 = scalar_lea.vmem %s0, %s344
      %p346 = pneg %p43
      %p347 = pneg %p40
      %p348 = pneg %p64
      %p349 = pneg %p61
      %p350 = pneg %p85
      %p351 = pneg %p82
      %p352 = pneg %p106
      %p353 = pneg %p103
      %p354 = pneg %p127
      %p355 = pneg %p124
      %p356 = pneg %p148
      %p357 = pneg %p145
      %p358 = pneg %p169
      %p359 = pneg %p166
      %p360 = pneg %p190
      %p361 = pneg %p187
      %p362 = pneg %p211
      %p363 = pneg %p208
      %p364 = pneg %p232
      %p365 = pneg %p229
      %p366 = pneg %p253
      %p367 = pneg %p250
      %p368 = pneg %p279
      %p369 = pneg %p276
      %p370 = scmp.lt.s32.totalorder %s22, 1
      %s371 = scalar_select %p370, %s22, 1
      %s372 = smul.addr %s371, 8
      %s373 = scalar_lea.vmem %s11, %s372
      %p374 = scmp.lt.s32.totalorder %s22, 1
      %s375 = scalar_select %p374, %s22, 1
      %s376 = smul.addr %s375, 8
      %s377 = scalar_lea.vmem %s0, %s376
      %p378 = scmp.lt.s32.totalorder %s22, 1
      %s379 = scalar_select %p378, %s22, 1
      %s380 = smul.addr %s379, 8
      %s381 = scalar_lea.vmem %s11, %s380
      %v382 = vld [vmem:[%s377] sm:$0xff]
      %v383 = vld [vmem:[%s1] sm:$0xff]
      %v384 = vld [vmem:[%s1 + $0x8] sm:$0xff]
      %v385 = vld [vmem:[%s1 + $0x10] sm:$0xff]
      %v386 = vld [vmem:[%s1 + $0x18] sm:$0xff]
      %v387 = vld [vmem:[%s2] sm:$0x1]
      %v389 = vlaneseq
      %v390 = vshrl.u32 %v389, 7
      %v391 = vsub.s32 0, %v390
      %v392 = vrot.slane %v387, %v391
      %vm394 = vcmask 261120
      %v396 = vsel %vm394, %v382, 0
      %398 = vmatprep.subr.mxu0 0.0
      %399 = vmatpush1.msra.mxu0 0.0
      %400 = vmatprep.subr.mxu0 0.0
      %401 = vmatpush1.msra.mxu0 0.0
      %402 = vmatprep.subr.mxu0 0.0
      %403 = vmatpush1.msra.mxu0 0.0
      %404 = vmatprep.subr.mxu0 0.0
      %405 = vmatpush1.msra.mxu0 0.0
      %406 = vmatprep.subr.mxu0 0.0
      %407 = vmatpush1.msra.mxu0 0.0
      %408 = vmatprep.subr.mxu0 0.0
      %409 = vmatpush1.msra.mxu0 0.0
      %410 = vmatprep.subr.mxu0 0.0
      %411 = vmatpush1.msra.mxu0 0.0
      %412 = vmatprep.subr.mxu0 0.0
      %413 = vmatpush1.msra.mxu0 0.0
      %414 = vmatprep.subr.mxu0 0.0
      %415 = vmatpush1.msra.mxu0 0.0
      %416 = vmatprep.subr.mxu0 0.0
      %417 = vmatpush1.msra.mxu0 0.0
      %418 = vmatprep.subr.mxu0 0.0
      %419 = vmatpush1.msra.mxu0 0.0
      %420 = vmatprep.subr.mxu0 0.0
      %421 = vmatpush1.msra.mxu0 0.0
      %422 = vmatprep.subr.mxu0 0.0
      %423 = vmatpush1.msra.mxu0 %v386
      %424 = vmatprep.subr.mxu0 0.0
      %425 = vmatpush1.msra.mxu0 %v385
      %426 = vmatprep.subr.mxu0 0.0
      %427 = vmatpush1.msra.mxu0 %v384
      %428 = vmatprep.subr.mxu0 0.0
      %429 = vmatpush1.msra.mxu0 %v383
      %430 = vmatprep.subr.mxu0 0.0
      %431 = vmatpush2.msra.mxu0 0.0
      %432 = vmatprep.subr.mxu0 0.0
      %433 = vmatpush2.msra.mxu0 0.0
      %434 = vmatprep.subr.mxu0 0.0
      %435 = vmatpush2.msra.mxu0 0.0
      %436 = vmatprep.subr.mxu0 0.0
      %437 = vmatpush2.msra.mxu0 0.0
      %438 = vmatprep.subr.mxu0 0.0
      %439 = vmatpush2.msra.mxu0 0.0
      %440 = vmatprep.subr.mxu0 0.0
      %441 = vmatpush2.msra.mxu0 0.0
      %442 = vmatprep.subr.mxu0 0.0
      %443 = vmatpush2.msra.mxu0 0.0
      %444 = vmatprep.subr.mxu0 0.0
      %445 = vmatpush2.msra.mxu0 0.0
      %446 = vmatprep.subr.mxu0 0.0
      %447 = vmatpush2.msra.mxu0 0.0
      %448 = vmatprep.subr.mxu0 0.0
      %449 = vmatpush2.msra.mxu0 0.0
      %450 = vmatprep.subr.mxu0 0.0
      %451 = vmatpush2.msra.mxu0 0.0
      %452 = vmatprep.subr.mxu0 0.0
      %453 = vmatpush2.msra.mxu0 0.0
      %454 = vmatprep.subr.mxu0 0.0
      %455 = vmatpush2.msra.mxu0 0.0
      %456 = vmatprep.subr.mxu0 0.0
      %457 = vmatpush2.msra.mxu0 0.0
      %458 = vmatprep.subr.mxu0 0.0
      %459 = vmatpush2.msra.mxu0 0.0
      %460 = vmatprep.subr.mxu0 0.0
      %461 = vmatpush2.msra.mxu0 0.0
      %462 = vmatprep.mubr.f32.mxu0 0.0
      %463 = vmatmul.mubr.f32.gmra.mxu0 %v396
      %v464 = vpop.f32.mrf.mxu0
      %v465 = vadd.f32 %v392, %v464
      %v466 = vpop.f32.mrf.mxu0
      %467 = vdwg.mxu0
      %v468 = vmax.f32 %v465, 0.0
      %v469 = vld [vmem:[%s3] sm:$0xff]
      %v470 = vld [vmem:[%s3 + $0x8] sm:$0xff]
      %v471 = vld [vmem:[%s3 + $0x10] sm:$0xff]
      %v472 = vld [vmem:[%s3 + $0x18] sm:$0xff]
      %v473 = vld [vmem:[%s3 + $0x20] sm:$0xff]
      %v474 = vld [vmem:[%s3 + $0x28] sm:$0xff]
      %v475 = vld [vmem:[%s3 + $0x30] sm:$0xff]
      %v476 = vld [vmem:[%s3 + $0x38] sm:$0xff]
      %v477 = vld [vmem:[%s4] sm:$0x1]
      %v479 = vlaneseq
      %v480 = vshrl.u32 %v479, 7
      %v481 = vsub.s32 0, %v480
      %v482 = vrot.slane %v477, %v481
      %vm484 = vcmask 523264
      %v486 = vsel %vm484, %v468, 0
      %488 = vmatprep.subr.mxu0 0.0
      %489 = vmatpush1.msra.mxu0 0.0
      %490 = vmatprep.subr.mxu0 0.0
      %491 = vmatpush1.msra.mxu0 0.0
      %492 = vmatprep.subr.mxu0 0.0
      %493 = vmatpush1.msra.mxu0 0.0
      %494 = vmatprep.subr.mxu0 0.0
      %495 = vmatpush1.msra.mxu0 0.0
      %496 = vmatprep.subr.mxu0 0.0
      %497 = vmatpush1.msra.mxu0 0.0
      %498 = vmatprep.subr.mxu0 0.0
      %499 = vmatpush1.msra.mxu0 0.0
      %500 = vmatprep.subr.mxu0 0.0
      %501 = vmatpush1.msra.mxu0 0.0
      %502 = vmatprep.subr.mxu0 0.0
      %503 = vmatpush1.msra.mxu0 0.0
      %504 = vmatprep.subr.mxu0 0.0
      %505 = vmatpush1.msra.mxu0 %v476
      %506 = vmatprep.subr.mxu0 0.0
      %507 = vmatpush1.msra.mxu0 %v475
      %508 = vmatprep.subr.mxu0 0.0
      %509 = vmatpush1.msra.mxu0 %v474
      %510 = vmatprep.subr.mxu0 0.0
      %511 = vmatpush1.msra.mxu0 %v473
      %512 = vmatprep.subr.mxu0 0.0
      %513 = vmatpush1.msra.mxu0 %v472
      %514 = vmatprep.subr.mxu0 0.0
      %515 = vmatpush1.msra.mxu0 %v471
      %516 = vmatprep.subr.mxu0 0.0
      %517 = vmatpush1.msra.mxu0 %v470
      %518 = vmatprep.subr.mxu0 0.0
      %519 = vmatpush1.msra.mxu0 %v469
      %520 = vmatprep.subr.mxu0 0.0
      %521 = vmatpush2.msra.mxu0 0.0
      %522 = vmatprep.subr.mxu0 0.0
      %523 = vmatpush2.msra.mxu0 0.0
      %524 = vmatprep.subr.mxu0 0.0
      %525 = vmatpush2.msra.mxu0 0.0
      %526 = vmatprep.subr.mxu0 0.0
      %527 = vmatpush2.msra.mxu0 0.0
      %528 = vmatprep.subr.mxu0 0.0
      %529 = vmatpush2.msra.mxu0 0.0
      %530 = vmatprep.subr.mxu0 0.0
      %531 = vmatpush2.msra.mxu0 0.0
      %532 = vmatprep.subr.mxu0 0.0
      %533 = vmatpush2.msra.mxu0 0.0
      %534 = vmatprep.subr.mxu0 0.0
      %535 = vmatpush2.msra.mxu0 0.0
      %536 = vmatprep.subr.mxu0 0.0
      %537 = vmatpush2.msra.mxu0 0.0
      %538 = vmatprep.subr.mxu0 0.0
      %539 = vmatpush2.msra.mxu0 0.0
      %540 = vmatprep.subr.mxu0 0.0
      %541 = vmatpush2.msra.mxu0 0.0
      %542 = vmatprep.subr.mxu0 0.0
      %543 = vmatpush2.msra.mxu0 0.0
      %544 = vmatprep.subr.mxu0 0.0
      %545 = vmatpush2.msra.mxu0 0.0
      %546 = vmatprep.subr.mxu0 0.0
      %547 = vmatpush2.msra.mxu0 0.0
      %548 = vmatprep.subr.mxu0 0.0
      %549 = vmatpush2.msra.mxu0 0.0
      %550 = vmatprep.subr.mxu0 0.0
      %551 = vmatpush2.msra.mxu0 0.0
      %552 = vmatprep.mubr.f32.mxu0 0.0
      %553 = vmatmul.mubr.f32.gmra.mxu0 %v486
      %v554 = vpop.f32.mrf.mxu0
      %v555 = vadd.f32 %v482, %v554
      %v556 = vpop.f32.mrf.mxu0
      %557 = vdwg.mxu0
      %v558 = vadd.f32 %v555, %v382
      %v559 = vmax.f32 %v558, 0.0
      %v560 = vld [vmem:[%s5] sm:$0xff]
      %v561 = vld [vmem:[%s5 + $0x8] sm:$0xff]
      %v562 = vld [vmem:[%s5 + $0x10] sm:$0xff]
      %v563 = vld [vmem:[%s5 + $0x18] sm:$0xff]
      %v564 = vld [vmem:[%s6] sm:$0x1]
      %v566 = vlaneseq
      %v567 = vshrl.u32 %v566, 7
      %v568 = vsub.s32 0, %v567
      %v569 = vrot.slane %v564, %v568
      %v572 = vsel %vm394, %v559, 0
      %574 = vmatprep.subr.mxu0 0.0
      %575 = vmatpush1.msra.mxu0 0.0
      %576 = vmatprep.subr.mxu0 0.0
      %577 = vmatpush1.msra.mxu0 0.0
      %578 = vmatprep.subr.mxu0 0.0
      %579 = vmatpush1.msra.mxu0 0.0
      %580 = vmatprep.subr.mxu0 0.0
      %581 = vmatpush1.msra.mxu0 0.0
      %582 = vmatprep.subr.mxu0 0.0
      %583 = vmatpush1.msra.mxu0 0.0
      %584 = vmatprep.subr.mxu0 0.0
      %585 = vmatpush1.msra.mxu0 0.0
      %586 = vmatprep.subr.mxu0 0.0
      %587 = vmatpush1.msra.mxu0 0.0
      %588 = vmatprep.subr.mxu0 0.0
      %589 = vmatpush1.msra.mxu0 0.0
      %590 = vmatprep.subr.mxu0 0.0
      %591 = vmatpush1.msra.mxu0 0.0
      %592 = vmatprep.subr.mxu0 0.0
      %593 = vmatpush1.msra.mxu0 0.0
      %594 = vmatprep.subr.mxu0 0.0
      %595 = vmatpush1.msra.mxu0 0.0
      %596 = vmatprep.subr.mxu0 0.0
      %597 = vmatpush1.msra.mxu0 0.0
      %598 = vmatprep.subr.mxu0 0.0
      %599 = vmatpush1.msra.mxu0 %v563
      %600 = vmatprep.subr.mxu0 0.0
      %601 = vmatpush1.msra.mxu0 %v562
      %602 = vmatprep.subr.mxu0 0.0
      %603 = vmatpush1.msra.mxu0 %v561
      %604 = vmatprep.subr.mxu0 0.0
      %605 = vmatpush1.msra.mxu0 %v560
      %606 = vmatprep.subr.mxu0 0.0
      %607 = vmatpush2.msra.mxu0 0.0
      %608 = vmatprep.subr.mxu0 0.0
      %609 = vmatpush2.msra.mxu0 0.0
      %610 = vmatprep.subr.mxu0 0.0
      %611 = vmatpush2.msra.mxu0 0.0
      %612 = vmatprep.subr.mxu0 0.0
      %613 = vmatpush2.msra.mxu0 0.0
      %614 = vmatprep.subr.mxu0 0.0
      %615 = vmatpush2.msra.mxu0 0.0
      %616 = vmatprep.subr.mxu0 0.0
      %617 = vmatpush2.msra.mxu0 0.0
      %618 = vmatprep.subr.mxu0 0.0
      %619 = vmatpush2.msra.mxu0 0.0
      %620 = vmatprep.subr.mxu0 0.0
      %621 = vmatpush2.msra.mxu0 0.0
      %622 = vmatprep.subr.mxu0 0.0
      %623 = vmatpush2.msra.mxu0 0.0
      %624 = vmatprep.subr.mxu0 0.0
      %625 = vmatpush2.msra.mxu0 0.0
      %626 = vmatprep.subr.mxu0 0.0
      %627 = vmatpush2.msra.mxu0 0.0
      %628 = vmatprep.subr.mxu0 0.0
      %629 = vmatpush2.msra.mxu0 0.0
      %630 = vmatprep.subr.mxu0 0.0
      %631 = vmatpush2.msra.mxu0 0.0
      %632 = vmatprep.subr.mxu0 0.0
      %633 = vmatpush2.msra.mxu0 0.0
      %634 = vmatprep.subr.mxu0 0.0
      %635 = vmatpush2.msra.mxu0 0.0
      %636 = vmatprep.subr.mxu0 0.0
      %637 = vmatpush2.msra.mxu0 0.0
      %638 = vmatprep.mubr.f32.mxu0 0.0
      %639 = vmatmul.mubr.f32.gmra.mxu0 %v572
      %v640 = vpop.f32.mrf.mxu0
      %v641 = vadd.f32 %v569, %v640
      %v642 = vpop.f32.mrf.mxu0
      %643 = vdwg.mxu0
      %v644 = vmax.f32 %v641, 0.0
      %v645 = vld [vmem:[%s7] sm:$0xff]
      %v646 = vld [vmem:[%s7 + $0x8] sm:$0xff]
      %v647 = vld [vmem:[%s7 + $0x10] sm:$0xff]
      %v648 = vld [vmem:[%s7 + $0x18] sm:$0xff]
      %v649 = vld [vmem:[%s7 + $0x20] sm:$0xff]
      %v650 = vld [vmem:[%s7 + $0x28] sm:$0xff]
      %v651 = vld [vmem:[%s7 + $0x30] sm:$0xff]
      %v652 = vld [vmem:[%s7 + $0x38] sm:$0xff]
      %v653 = vld [vmem:[%s8] sm:$0x1]
      %v655 = vlaneseq
      %v656 = vshrl.u32 %v655, 7
      %v657 = vsub.s32 0, %v656
      %v658 = vrot.slane %v653, %v657
      %v661 = vsel %vm484, %v644, 0
      %663 = vmatprep.subr.mxu0 0.0
      %664 = vmatpush1.msra.mxu0 0.0
      %665 = vmatprep.subr.mxu0 0.0
      %666 = vmatpush1.msra.mxu0 0.0
      %667 = vmatprep.subr.mxu0 0.0
      %668 = vmatpush1.msra.mxu0 0.0
      %669 = vmatprep.subr.mxu0 0.0
      %670 = vmatpush1.msra.mxu0 0.0
      %671 = vmatprep.subr.mxu0 0.0
      %672 = vmatpush1.msra.mxu0 0.0
      %673 = vmatprep.subr.mxu0 0.0
      %674 = vmatpush1.msra.mxu0 0.0
      %675 = vmatprep.subr.mxu0 0.0
      %676 = vmatpush1.msra.mxu0 0.0
      %677 = vmatprep.subr.mxu0 0.0
      %678 = vmatpush1.msra.mxu0 0.0
      %679 = vmatprep.subr.mxu0 0.0
      %680 = vmatpush1.msra.mxu0 %v652
      %681 = vmatprep.subr.mxu0 0.0
      %682 = vmatpush1.msra.mxu0 %v651
      %683 = vmatprep.subr.mxu0 0.0
      %684 = vmatpush1.msra.mxu0 %v650
      %685 = vmatprep.subr.mxu0 0.0
      %686 = vmatpush1.msra.mxu0 %v649
      %687 = vmatprep.subr.mxu0 0.0
      %688 = vmatpush1.msra.mxu0 %v648
      %689 = vmatprep.subr.mxu0 0.0
      %690 = vmatpush1.msra.mxu0 %v647
      %691 = vmatprep.subr.mxu0 0.0
      %692 = vmatpush1.msra.mxu0 %v646
      %693 = vmatprep.subr.mxu0 0.0
      %694 = vmatpush1.msra.mxu0 %v645
      %695 = vmatprep.subr.mxu0 0.0
      %696 = vmatpush2.msra.mxu0 0.0
      %697 = vmatprep.subr.mxu0 0.0
      %698 = vmatpush2.msra.mxu0 0.0
      %699 = vmatprep.subr.mxu0 0.0
      %700 = vmatpush2.msra.mxu0 0.0
      %701 = vmatprep.subr.mxu0 0.0
      %702 = vmatpush2.msra.mxu0 0.0
      %703 = vmatprep.subr.mxu0 0.0
      %704 = vmatpush2.msra.mxu0 0.0
      %705 = vmatprep.subr.mxu0 0.0
      %706 = vmatpush2.msra.mxu0 0.0
      %707 = vmatprep.subr.mxu0 0.0
      %708 = vmatpush2.msra.mxu0 0.0
      %709 = vmatprep.subr.mxu0 0.0
      %710 = vmatpush2.msra.mxu0 0.0
      %711 = vmatprep.subr.mxu0 0.0
      %712 = vmatpush2.msra.mxu0 0.0
      %713 = vmatprep.subr.mxu0 0.0
      %714 = vmatpush2.msra.mxu0 0.0
      %715 = vmatprep.subr.mxu0 0.0
      %716 = vmatpush2.msra.mxu0 0.0
      %717 = vmatprep.subr.mxu0 0.0
      %718 = vmatpush2.msra.mxu0 0.0
      %719 = vmatprep.subr.mxu0 0.0
      %720 = vmatpush2.msra.mxu0 0.0
      %721 = vmatprep.subr.mxu0 0.0
      %722 = vmatpush2.msra.mxu0 0.0
      %723 = vmatprep.subr.mxu0 0.0
      %724 = vmatpush2.msra.mxu0 0.0
      %725 = vmatprep.subr.mxu0 0.0
      %726 = vmatpush2.msra.mxu0 0.0
      %727 = vmatprep.mubr.f32.mxu0 0.0
      %728 = vmatmul.mubr.f32.gmra.mxu0 %v661
      %v729 = vpop.f32.mrf.mxu0
      %v730 = vadd.f32 %v658, %v729
      %v731 = vpop.f32.mrf.mxu0
      %732 = vdwg.mxu0
      %v733 = vadd.f32 %v730, %v559
      %v734 = vmax.f32 %v733, 0.0
      %v735 = vld [vmem:[%s9] sm:$0xff]
      %v736 = vld [vmem:[%s9 + $0x8] sm:$0xff]
      %v737 = vld [vmem:[%s9 + $0x10] sm:$0xff]
      %v738 = vld [vmem:[%s9 + $0x18] sm:$0xff]
      %v739 = vld [vmem:[%s10] sm:$0x1]
      %v741 = vlaneseq
      %v742 = vshrl.u32 %v741, 7
      %v743 = vsub.s32 0, %v742
      %v744 = vrot.slane %v739, %v743
      %v747 = vsel %vm394, %v734, 0
      %749 = vmatprep.subr.mxu0 0.0
      %750 = vmatpush1.msra.mxu0 0.0
      %751 = vmatprep.subr.mxu0 0.0
      %752 = vmatpush1.msra.mxu0 0.0
      %753 = vmatprep.subr.mxu0 0.0
      %754 = vmatpush1.msra.mxu0 0.0
      %755 = vmatprep.subr.mxu0 0.0
      %756 = vmatpush1.msra.mxu0 0.0
      %757 = vmatprep.subr.mxu0 0.0
      %758 = vmatpush1.msra.mxu0 0.0
      %759 = vmatprep.subr.mxu0 0.0
      %760 = vmatpush1.msra.mxu0 0.0
      %761 = vmatprep.subr.mxu0 0.0
      %762 = vmatpush1.msra.mxu0 0.0
      %763 = vmatprep.subr.mxu0 0.0
      %764 = vmatpush1.msra.mxu0 0.0
      %765 = vmatprep.subr.mxu0 0.0
      %766 = vmatpush1.msra.mxu0 0.0
      %767 = vmatprep.subr.mxu0 0.0
      %768 = vmatpush1.msra.mxu0 0.0
      %769 = vmatprep.subr.mxu0 0.0
      %770 = vmatpush1.msra.mxu0 0.0
      %771 = vmatprep.subr.mxu0 0.0
      %772 = vmatpush1.msra.mxu0 0.0
      %773 = vmatprep.subr.mxu0 0.0
      %774 = vmatpush1.msra.mxu0 %v738
      %775 = vmatprep.subr.mxu0 0.0
      %776 = vmatpush1.msra.mxu0 %v737
      %777 = vmatprep.subr.mxu0 0.0
      %778 = vmatpush1.msra.mxu0 %v736
      %779 = vmatprep.subr.mxu0 0.0
      %780 = vmatpush1.msra.mxu0 %v735
      %781 = vmatprep.subr.mxu0 0.0
      %782 = vmatpush2.msra.mxu0 0.0
      %783 = vmatprep.subr.mxu0 0.0
      %784 = vmatpush2.msra.mxu0 0.0
      %785 = vmatprep.subr.mxu0 0.0
      %786 = vmatpush2.msra.mxu0 0.0
      %787 = vmatprep.subr.mxu0 0.0
      %788 = vmatpush2.msra.mxu0 0.0
      %789 = vmatprep.subr.mxu0 0.0
      %790 = vmatpush2.msra.mxu0 0.0
      %791 = vmatprep.subr.mxu0 0.0
      %792 = vmatpush2.msra.mxu0 0.0
      %793 = vmatprep.subr.mxu0 0.0
      %794 = vmatpush2.msra.mxu0 0.0
      %795 = vmatprep.subr.mxu0 0.0
      %796 = vmatpush2.msra.mxu0 0.0
      %797 = vmatprep.subr.mxu0 0.0
      %798 = vmatpush2.msra.mxu0 0.0
      %799 = vmatprep.subr.mxu0 0.0
      %800 = vmatpush2.msra.mxu0 0.0
      %801 = vmatprep.subr.mxu0 0.0
      %802 = vmatpush2.msra.mxu0 0.0
      %803 = vmatprep.subr.mxu0 0.0
      %804 = vmatpush2.msra.mxu0 0.0
      %805 = vmatprep.subr.mxu0 0.0
      %806 = vmatpush2.msra.mxu0 0.0
      %807 = vmatprep.subr.mxu0 0.0
      %808 = vmatpush2.msra.mxu0 0.0
      %809 = vmatprep.subr.mxu0 0.0
      %810 = vmatpush2.msra.mxu0 0.0
      %811 = vmatprep.subr.mxu0 0.0
      %812 = vmatpush2.msra.mxu0 0.0
      %813 = vmatprep.mubr.f32.mxu0 0.0
      %814 = vmatmul.mubr.f32.gmra.mxu0 %v747
      %v815 = vpop.f32.mrf.mxu0
      %v816 = vadd.f32 %v744, %v815
      %v817 = vpop.f32.mrf.mxu0
      %818 = vdwg.mxu0
      %vm819 = vcmask 15360
      %820 = vst.msk [vmem:[%s381] sm:$0xff] %vm819, %v816
      %p821 = scmp.lt.s32.totalorder %s22, 1
      %s822 = scalar_select %p821, %s22, 1
      %s823 = smul.addr %s822, 8
      %s824 = scalar_lea.vmem %s11, %s823
      // Predicated region
      $region65: #{tpu_custom_call.1} parent=63 // pred_check
        %p825 = pneg %p276
      $region66: #{tpu_custom_call.1} parent=63 // pred_check_branch
        %827 = sbr.rel (%p825) target = $region68
      $region67: #{tpu_custom_call.1} parent=63 // pred_region
        _
      $region68: #{tpu_custom_call.1} parent=63 // pred_fallthru
        _
    $region64: #{tpu_custom_call.1} parent=5 // pred_fallthru
      _
    %p828 = scmp.le.s32.totalorder 2, %s17
    // Predicated region
    $region69: #{tpu_custom_call.1} parent=5 // pred_check
      %p829 = pneg %p828
    $region70: #{tpu_custom_call.1} parent=5 // pred_check_branch
      %831 = sbr.rel (%p829) target = $region72
    $region71: #{tpu_custom_call.1} parent=5 // pred_region
      %s832 = ssub.s32 %s17, 2
      // Predicated region
      $region73: #{tpu_custom_call.1} parent=71 // pred_check
        %p833 = pneg %p282
      $region74: #{tpu_custom_call.1} parent=71 // pred_check_branch
        %835 = sbr.rel (%p833) target = $region76
      $region75: #{tpu_custom_call.1} parent=71 // pred_region
        %p836 = scmp.lt.s32.totalorder %s23, 1
        %s837 = scalar_select %p836, %s23, 1
        %s838 = smul.addr %s837, 8
        %s839 = scalar_lea.vmem %s11, %s838
      $region76: #{tpu_custom_call.1} parent=71 // pred_fallthru
        _
    $region72: #{tpu_custom_call.1} parent=5 // pred_fallthru
      _
  $region6: #{tpu_custom_call.1} parent=0 // loop_footer
    %s21 = sadd.s32 1, %s17
  $region7: #{tpu_custom_call.1} parent=0 // loop_footer_branch
    %16 = sbr.rel target = $region3
  $region8: #{tpu_custom_call.1} parent=0 // loop_exit
    _

// kernel: tpu_custom_call.1
$region0: #{tpu_custom_call.1}
  #allocation0 [shape = 'u32[]', space=smem, size = 0x4, offset = 0x4, fixed_abs, tag = 'smem constant byte address 0x4 - core index']
  #allocation1 [shape = 'u32[144,128]{1,0:T(1,128)}', space=vmem, size = 0x12000, scoped, tag = 'internal scratch']
  %s0 = inlined_call_operand.vmem [shape: f32[16,32], index: 0, kind: input, shape index: {}]
  %s1 = inlined_call_operand.vmem [shape: f32[32,64], index: 1, kind: input, shape index: {}]
  %s2 = inlined_call_operand.vmem [shape: f32[1,64], index: 2, kind: input, shape index: {}]
  %s3 = inlined_call_operand.vmem [shape: f32[64,32], index: 3, kind: input, shape index: {}]
  %s4 = inlined_call_operand.vmem [shape: f32[1,32], index: 4, kind: input, shape index: {}]
  %s5 = inlined_call_operand.vmem [shape: f32[32,64], index: 5, kind: input, shape index: {}]
  %s6 = inlined_call_operand.vmem [shape: f32[1,64], index: 6, kind: input, shape index: {}]
  %s7 = inlined_call_operand.vmem [shape: f32[64,32], index: 7, kind: input, shape index: {}]
  %s8 = inlined_call_operand.vmem [shape: f32[1,32], index: 8, kind: input, shape index: {}]
  %s9 = inlined_call_operand.vmem [shape: f32[32,2], index: 9, kind: input, shape index: {}]
  %s10 = inlined_call_operand.vmem [shape: f32[1,2], index: 10, kind: input, shape index: {}]
  %s11 = inlined_call_operand.vmem [shape: f32[16,2], index: 11, kind: output, shape index: {}]
  %s12 = sld [smem:[#allocation0]]
  $region77: #{tpu_custom_call.1} parent=0
    _
  %s14 = ssub.s32 1, %s12
  %s15 = scalar_select 0, %s14, %s12
  loop: start=0, step=1, limit=4
  $region2: #{tpu_custom_call.1} parent=0 // loop_pre_header
    _
  $region3: #{tpu_custom_call.1} parent=0 // loop_header
    %s17 = sphi 0, %s21
    %p18 = scmp.ge.s32.totalorder %s17, 4
    %s27 = sphi 0, %s29
    %s30 = sphi 0, %s27
    %s31 = sphi 0, %s30
    %s47 = sphi 0, %s31
    %s51 = sphi 0, %s51
    %s53 = sphi 0, %s51
    %s54 = sphi 0, %s53
    %s68 = sphi 0, %s54
    %s72 = sphi 0, %s72
    %s74 = sphi 0, %s72
    %s75 = sphi 0, %s74
    %s89 = sphi 0, %s75
    %s93 = sphi 0, %s93
    %s95 = sphi 0, %s93
    %s96 = sphi 0, %s95
    %s110 = sphi 0, %s96
    %s114 = sphi 0, %s114
    %s116 = sphi 0, %s114
    %s117 = sphi 0, %s116
    %s131 = sphi 0, %s117
    %s135 = sphi 0, %s135
    %s137 = sphi 0, %s135
    %s138 = sphi 0, %s137
    %s152 = sphi 0, %s138
    %s156 = sphi 0, %s156
    %s158 = sphi 0, %s156
    %s159 = sphi 0, %s158
    %s173 = sphi 0, %s159
    %s177 = sphi 0, %s177
    %s179 = sphi 0, %s177
    %s180 = sphi 0, %s179
    %s194 = sphi 0, %s180
    %s198 = sphi 0, %s198
    %s200 = sphi 0, %s198
    %s201 = sphi 0, %s200
    %s215 = sphi 0, %s201
    %s219 = sphi 0, %s219
    %s221 = sphi 0, %s219
    %s222 = sphi 0, %s221
    %s236 = sphi 0, %s222
    %s240 = sphi 0, %s240
    %s242 = sphi 0, %s240
    %s243 = sphi 0, %s242
    %s257 = sphi 0, %s243
    %s263 = sphi 0, %s265
    %s266 = sphi 0, %s263
    %s267 = sphi 0, %s266
    %s283 = sphi 0, %s267
  $region4: #{tpu_custom_call.1} parent=0 // loop_header_branch
    %20 = sbr.rel (%p18) target = $region8
  $region5: #{tpu_custom_call.1} parent=0 // loop_body
    %s22 = ssub.s32 %s17, 1
    %s23 = ssub.s32 %s17, 2
    %s24 = sadd.s32 %s17, 1
    %s25 = ssub.s32 %s17, %s24
    %p26 = scmp.eq.s32.totalorder %s25, 0
    %s28 = sadd.s32 %s27, 1
    %s29 = scalar_select %p26, %s27, %s28
    %p32 = pneg %p26
    %p33 = scmp.eq.s32.totalorder %s17, 1
    %p34 = por %p32, %p33
    %p35 = scmp.ne.s32.totalorder %s27, %s30
    %p36 = scmp.eq.s32.totalorder %s17, 0
    %p37 = por %p35, %p36
    %p38 = scmp.ne.s32.totalorder %s27, %s30
    %p39 = scmp.eq.s32.totalorder %s22, 1
    %p40 = por %p38, %p39
    %p41 = scmp.ne.s32.totalorder %s30, %s31
    %p42 = scmp.eq.s32.totalorder %s22, 0
    %p43 = por %p41, %p42
    %p44 = scmp.ne.s32.totalorder %s30, %s31
    %p45 = scmp.eq.s32.totalorder %s23, 1
    %p46 = por %p44, %p45
    %p48 = scmp.ne.s32.totalorder %s31, %s47
    %p49 = scmp.eq.s32.totalorder %s23, 0
    %p50 = por %p48, %p49
    %s52 = sadd.s32 %s51, 1
    %p55 = scmp.eq.s32.totalorder %s17, 1
    %p56 = scmp.ne.s32.totalorder %s51, %s53
    %p57 = scmp.eq.s32.totalorder %s17, 0
    %p58 = por %p56, %p57
    %p59 = scmp.ne.s32.totalorder %s51, %s53
    %p60 = scmp.eq.s32.totalorder %s22, 1
    %p61 = por %p59, %p60
    %p62 = scmp.ne.s32.totalorder %s53, %s54
    %p63 = scmp.eq.s32.totalorder %s22, 0
    %p64 = por %p62, %p63
    %p65 = scmp.ne.s32.totalorder %s53, %s54
    %p66 = scmp.eq.s32.totalorder %s23, 1
    %p67 = por %p65, %p66
    %p69 = scmp.ne.s32.totalorder %s54, %s68
    %p70 = scmp.eq.s32.totalorder %s23, 0
    %p71 = por %p69, %p70
    %s73 = sadd.s32 %s72, 1
    %p76 = scmp.eq.s32.totalorder %s17, 1
    %p77 = scmp.ne.s32.totalorder %s72, %s74
    %p78 = scmp.eq.s32.totalorder %s17, 0
    %p79 = por %p77, %p78
    %p80 = scmp.ne.s32.totalorder %s72, %s74
    %p81 = scmp.eq.s32.totalorder %s22, 1
    %p82 = por %p80, %p81
    %p83 = scmp.ne.s32.totalorder %s74, %s75
    %p84 = scmp.eq.s32.totalorder %s22, 0
    %p85 = por %p83, %p84
    %p86 = scmp.ne.s32.totalorder %s74, %s75
    %p87 = scmp.eq.s32.totalorder %s23, 1
    %p88 = por %p86, %p87
    %p90 = scmp.ne.s32.totalorder %s75, %s89
    %p91 = scmp.eq.s32.totalorder %s23, 0
    %p92 = por %p90, %p91
    %s94 = sadd.s32 %s93, 1
    %p97 = scmp.eq.s32.totalorder %s17, 1
    %p98 = scmp.ne.s32.totalorder %s93, %s95
    %p99 = scmp.eq.s32.totalorder %s17, 0
    %p100 = por %p98, %p99
    %p101 = scmp.ne.s32.totalorder %s93, %s95
    %p102 = scmp.eq.s32.totalorder %s22, 1
    %p103 = por %p101, %p102
    %p104 = scmp.ne.s32.totalorder %s95, %s96
    %p105 = scmp.eq.s32.totalorder %s22, 0
    %p106 = por %p104, %p105
    %p107 = scmp.ne.s32.totalorder %s95, %s96
    %p108 = scmp.eq.s32.totalorder %s23, 1
    %p109 = por %p107, %p108
    %p111 = scmp.ne.s32.totalorder %s96, %s110
    %p112 = scmp.eq.s32.totalorder %s23, 0
    %p113 = por %p111, %p112
    %s115 = sadd.s32 %s114, 1
    %p118 = scmp.eq.s32.totalorder %s17, 1
    %p119 = scmp.ne.s32.totalorder %s114, %s116
    %p120 = scmp.eq.s32.totalorder %s17, 0
    %p121 = por %p119, %p120
    %p122 = scmp.ne.s32.totalorder %s114, %s116
    %p123 = scmp.eq.s32.totalorder %s22, 1
    %p124 = por %p122, %p123
    %p125 = scmp.ne.s32.totalorder %s116, %s117
    %p126 = scmp.eq.s32.totalorder %s22, 0
    %p127 = por %p125, %p126
    %p128 = scmp.ne.s32.totalorder %s116, %s117
    %p129 = scmp.eq.s32.totalorder %s23, 1
    %p130 = por %p128, %p129
    %p132 = scmp.ne.s32.totalorder %s117, %s131
    %p133 = scmp.eq.s32.totalorder %s23, 0
    %p134 = por %p132, %p133
    %s136 = sadd.s32 %s135, 1
    %p139 = scmp.eq.s32.totalorder %s17, 1
    %p140 = scmp.ne.s32.totalorder %s135, %s137
    %p141 = scmp.eq.s32.totalorder %s17, 0
    %p142 = por %p140, %p141
    %p143 = scmp.ne.s32.totalorder %s135, %s137
    %p144 = scmp.eq.s32.totalorder %s22, 1
    %p145 = por %p143, %p144
    %p146 = scmp.ne.s32.totalorder %s137, %s138
    %p147 = scmp.eq.s32.totalorder %s22, 0
    %p148 = por %p146, %p147
    %p149 = scmp.ne.s32.totalorder %s137, %s138
    %p150 = scmp.eq.s32.totalorder %s23, 1
    %p151 = por %p149, %p150
    %p153 = scmp.ne.s32.totalorder %s138, %s152
    %p154 = scmp.eq.s32.totalorder %s23, 0
    %p155 = por %p153, %p154
    %s157 = sadd.s32 %s156, 1
    %p160 = scmp.eq.s32.totalorder %s17, 1
    %p161 = scmp.ne.s32.totalorder %s156, %s158
    %p162 = scmp.eq.s32.totalorder %s17, 0
    %p163 = por %p161, %p162
    %p164 = scmp.ne.s32.totalorder %s156, %s158
    %p165 = scmp.eq.s32.totalorder %s22, 1
    %p166 = por %p164, %p165
    %p167 = scmp.ne.s32.totalorder %s158, %s159
    %p168 = scmp.eq.s32.totalorder %s22, 0
    %p169 = por %p167, %p168
    %p170 = scmp.ne.s32.totalorder %s158, %s159
    %p171 = scmp.eq.s32.totalorder %s23, 1
    %p172 = por %p170, %p171
    %p174 = scmp.ne.s32.totalorder %s159, %s173
    %p175 = scmp.eq.s32.totalorder %s23, 0
    %p176 = por %p174, %p175
    %s178 = sadd.s32 %s177, 1
    %p181 = scmp.eq.s32.totalorder %s17, 1
    %p182 = scmp.ne.s32.totalorder %s177, %s179
    %p183 = scmp.eq.s32.totalorder %s17, 0
    %p184 = por %p182, %p183
    %p185 = scmp.ne.s32.totalorder %s177, %s179
    %p186 = scmp.eq.s32.totalorder %s22, 1
    %p187 = por %p185, %p186
    %p188 = scmp.ne.s32.totalorder %s179, %s180
    %p189 = scmp.eq.s32.totalorder %s22, 0
    %p190 = por %p188, %p189
    %p191 = scmp.ne.s32.totalorder %s179, %s180
    %p192 = scmp.eq.s32.totalorder %s23, 1
    %p193 = por %p191, %p192
    %p195 = scmp.ne.s32.totalorder %s180, %s194
    %p196 = scmp.eq.s32.totalorder %s23, 0
    %p197 = por %p195, %p196
    %s199 = sadd.s32 %s198, 1
    %p202 = scmp.eq.s32.totalorder %s17, 1
    %p203 = scmp.ne.s32.totalorder %s198, %s200
    %p204 = scmp.eq.s32.totalorder %s17, 0
    %p205 = por %p203, %p204
    %p206 = scmp.ne.s32.totalorder %s198, %s200
    %p207 = scmp.eq.s32.totalorder %s22, 1
    %p208 = por %p206, %p207
    %p209 = scmp.ne.s32.totalorder %s200, %s201
    %p210 = scmp.eq.s32.totalorder %s22, 0
    %p211 = por %p209, %p210
    %p212 = scmp.ne.s32.totalorder %s200, %s201
    %p213 = scmp.eq.s32.totalorder %s23, 1
    %p214 = por %p212, %p213
    %p216 = scmp.ne.s32.totalorder %s201, %s215
    %p217 = scmp.eq.s32.totalorder %s23, 0
    %p218 = por %p216, %p217
    %s220 = sadd.s32 %s219, 1
    %p223 = scmp.eq.s32.totalorder %s17, 1
    %p224 = scmp.ne.s32.totalorder %s219, %s221
    %p225 = scmp.eq.s32.totalorder %s17, 0
    %p226 = por %p224, %p225
    %p227 = scmp.ne.s32.totalorder %s219, %s221
    %p228 = scmp.eq.s32.totalorder %s22, 1
    %p229 = por %p227, %p228
    %p230 = scmp.ne.s32.totalorder %s221, %s222
    %p231 = scmp.eq.s32.totalorder %s22, 0
    %p232 = por %p230, %p231
    %p233 = scmp.ne.s32.totalorder %s221, %s222
    %p234 = scmp.eq.s32.totalorder %s23, 1
    %p235 = por %p233, %p234
    %p237 = scmp.ne.s32.totalorder %s222, %s236
    %p238 = scmp.eq.s32.totalorder %s23, 0
    %p239 = por %p237, %p238
    %s241 = sadd.s32 %s240, 1
    %p244 = scmp.eq.s32.totalorder %s17, 1
    %p245 = scmp.ne.s32.totalorder %s240, %s242
    %p246 = scmp.eq.s32.totalorder %s17, 0
    %p247 = por %p245, %p246
    %p248 = scmp.ne.s32.totalorder %s240, %s242
    %p249 = scmp.eq.s32.totalorder %s22, 1
    %p250 = por %p248, %p249
    %p251 = scmp.ne.s32.totalorder %s242, %s243
    %p252 = scmp.eq.s32.totalorder %s22, 0
    %p253 = por %p251, %p252
    %p254 = scmp.ne.s32.totalorder %s242, %s243
    %p255 = scmp.eq.s32.totalorder %s23, 1
    %p256 = por %p254, %p255
    %p258 = scmp.ne.s32.totalorder %s243, %s257
    %p259 = scmp.eq.s32.totalorder %s23, 0
    %p260 = por %p258, %p259
    %s261 = ssub.s32 %s17, %s24
    %p262 = scmp.eq.s32.totalorder %s261, 0
    %s264 = sadd.s32 %s263, 1
    %s265 = scalar_select %p262, %s263, %s264
    %p268 = pneg %p262
    %p269 = scmp.eq.s32.totalorder %s17, 1
    %p270 = por %p268, %p269
    %p271 = scmp.ne.s32.totalorder %s263, %s266
    %p272 = scmp.eq.s32.totalorder %s17, 0
    %p273 = por %p271, %p272
    %p274 = scmp.ne.s32.totalorder %s263, %s266
    %p275 = scmp.eq.s32.totalorder %s22, 1
    %p276 = por %p274, %p275
    %p277 = scmp.ne.s32.totalorder %s266, %s267
    %p278 = scmp.eq.s32.totalorder %s22, 0
    %p279 = por %p277, %p278
    %p280 = scmp.ne.s32.totalorder %s266, %s267
    %p281 = scmp.eq.s32.totalorder %s23, 1
    %p282 = por %p280, %p281
    %p284 = scmp.ne.s32.totalorder %s267, %s283
    %p285 = scmp.eq.s32.totalorder %s23, 0
    %p286 = por %p284, %p285
    %p287 = scmp.le.s32.totalorder 1, %s17
    %p288 = scmp.lt.s32.totalorder %s17, 3
    %p289 = pnand %p287, %p288
    %p290 = pneg %p289
    // Predicated region
    $region9: #{tpu_custom_call.1} parent=5 // pred_check
      _
    $region10: #{tpu_custom_call.1} parent=5 // pred_check_branch
      %292 = sbr.rel (%p289) target = $region12
    $region11: #{tpu_custom_call.1} parent=5 // pred_region
      %s293 = ssub.s32 %s17, 1
      // Predicated region
      $region13: #{tpu_custom_call.1} parent=11 // pred_check
        %p294 = pneg %p64
      $region14: #{tpu_custom_call.1} parent=11 // pred_check_branch
        %296 = sbr.rel (%p294) target = $region16
      $region15: #{tpu_custom_call.1} parent=11 // pred_region
        _
      $region16: #{tpu_custom_call.1} parent=11 // pred_fallthru
        _
      // Predicated region
      $region17: #{tpu_custom_call.1} parent=11 // pred_check
        %p297 = pneg %p85
      $region18: #{tpu_custom_call.1} parent=11 // pred_check_branch
        %299 = sbr.rel (%p297) target = $region20
      $region19: #{tpu_custom_call.1} parent=11 // pred_region
        _
      $region20: #{tpu_custom_call.1} parent=11 // pred_fallthru
        _
      // Predicated region
      $region21: #{tpu_custom_call.1} parent=11 // pred_check
        %p300 = pneg %p106
      $region22: #{tpu_custom_call.1} parent=11 // pred_check_branch
        %302 = sbr.rel (%p300) target = $region24
      $region23: #{tpu_custom_call.1} parent=11 // pred_region
        _
      $region24: #{tpu_custom_call.1} parent=11 // pred_fallthru
        _
      // Predicated region
      $region25: #{tpu_custom_call.1} parent=11 // pred_check
        %p303 = pneg %p127
      $region26: #{tpu_custom_call.1} parent=11 // pred_check_branch
        %305 = sbr.rel (%p303) target = $region28
      $region27: #{tpu_custom_call.1} parent=11 // pred_region
        _
      $region28: #{tpu_custom_call.1} parent=11 // pred_fallthru
        _
      // Predicated region
      $region29: #{tpu_custom_call.1} parent=11 // pred_check
        %p306 = pneg %p148
      $region30: #{tpu_custom_call.1} parent=11 // pred_check_branch
        %308 = sbr.rel (%p306) target = $region32
      $region31: #{tpu_custom_call.1} parent=11 // pred_region
        _
      $region32: #{tpu_custom_call.1} parent=11 // pred_fallthru
        _
      // Predicated region
      $region33: #{tpu_custom_call.1} parent=11 // pred_check
        %p309 = pneg %p169
      $region34: #{tpu_custom_call.1} parent=11 // pred_check_branch
        %311 = sbr.rel (%p309) target = $region36
      $region35: #{tpu_custom_call.1} parent=11 // pred_region
        _
      $region36: #{tpu_custom_call.1} parent=11 // pred_fallthru
        _
      // Predicated region
      $region37: #{tpu_custom_call.1} parent=11 // pred_check
        %p312 = pneg %p190
      $region38: #{tpu_custom_call.1} parent=11 // pred_check_branch
        %314 = sbr.rel (%p312) target = $region40
      $region39: #{tpu_custom_call.1} parent=11 // pred_region
        _
      $region40: #{tpu_custom_call.1} parent=11 // pred_fallthru
        _
      // Predicated region
      $region41: #{tpu_custom_call.1} parent=11 // pred_check
        %p315 = pneg %p211
      $region42: #{tpu_custom_call.1} parent=11 // pred_check_branch
        %317 = sbr.rel (%p315) target = $region44
      $region43: #{tpu_custom_call.1} parent=11 // pred_region
        _
      $region44: #{tpu_custom_call.1} parent=11 // pred_fallthru
        _
      // Predicated region
      $region45: #{tpu_custom_call.1} parent=11 // pred_check
        %p318 = pneg %p232
      $region46: #{tpu_custom_call.1} parent=11 // pred_check_branch
        %320 = sbr.rel (%p318) target = $region48
      $region47: #{tpu_custom_call.1} parent=11 // pred_region
        _
      $region48: #{tpu_custom_call.1} parent=11 // pred_fallthru
        _
      // Predicated region
      $region49: #{tpu_custom_call.1} parent=11 // pred_check
        %p321 = pneg %p253
      $region50: #{tpu_custom_call.1} parent=11 // pred_check_branch
        %323 = sbr.rel (%p321) target = $region52
      $region51: #{tpu_custom_call.1} parent=11 // pred_region
        _
      $region52: #{tpu_custom_call.1} parent=11 // pred_fallthru
        _
    $region12: #{tpu_custom_call.1} parent=5 // pred_fallthru
      _
    %p324 = scmp.lt.s32.totalorder %s17, 2
    // Predicated region
    $region53: #{tpu_custom_call.1} parent=5 // pred_check
      %p325 = pneg %p324
    $region54: #{tpu_custom_call.1} parent=5 // pred_check_branch
      %327 = sbr.rel (%p325) target = $region56
    $region55: #{tpu_custom_call.1} parent=5 // pred_region
      // Predicated region
      $region57: #{tpu_custom_call.1} parent=55 // pred_check
        %p328 = pneg %p37
      $region58: #{tpu_custom_call.1} parent=55 // pred_check_branch
        %330 = sbr.rel (%p328) target = $region60
      $region59: #{tpu_custom_call.1} parent=55 // pred_region
        %p331 = scmp.lt.s32.totalorder %s17, 1
        %s332 = scalar_select %p331, %s17, 1
        %s333 = smul.addr %s332, 8
        %s334 = scalar_lea.vmem %s0, %s333
      $region60: #{tpu_custom_call.1} parent=55 // pred_fallthru
        _
    $region56: #{tpu_custom_call.1} parent=5 // pred_fallthru
      _
    %p335 = scmp.le.s32.totalorder 1, %s17
    %p336 = scmp.lt.s32.totalorder %s17, 3
    %p337 = pnand %p335, %p336
    %p338 = pneg %p337
    // Predicated region
    $region61: #{tpu_custom_call.1} parent=5 // pred_check
      _
    $region62: #{tpu_custom_call.1} parent=5 // pred_check_branch
      %340 = sbr.rel (%p337) target = $region64
    $region63: #{tpu_custom_call.1} parent=5 // pred_region
      %s341 = ssub.s32 %s17, 1
      %p342 = scmp.lt.s32.totalorder %s22, 1
      %s343 = scalar_select %p342, %s22, 1
      %s344 = smul.addr %s343, 8
      %s345 = scalar_lea.vmem %s0, %s344
      %p346 = pneg %p43
      %p347 = pneg %p40
      %p348 = pneg %p64
      %p349 = pneg %p61
      %p350 = pneg %p85
      %p351 = pneg %p82
      %p352 = pneg %p106
      %p353 = pneg %p103
      %p354 = pneg %p127
      %p355 = pneg %p124
      %p356 = pneg %p148
      %p357 = pneg %p145
      %p358 = pneg %p169
      %p359 = pneg %p166
      %p360 = pneg %p190
      %p361 = pneg %p187
      %p362 = pneg %p211
      %p363 = pneg %p208
      %p364 = pneg %p232
      %p365 = pneg %p229
      %p366 = pneg %p253
      %p367 = pneg %p250
      %p368 = pneg %p279
      %p369 = pneg %p276
      %p370 = scmp.lt.s32.totalorder %s22, 1
      %s371 = scalar_select %p370, %s22, 1
      %s372 = smul.addr %s371, 8
      %s373 = scalar_lea.vmem %s11, %s372
      %p374 = scmp.lt.s32.totalorder %s22, 1
      %s375 = scalar_select %p374, %s22, 1
      %s376 = smul.addr %s375, 8
      %s377 = scalar_lea.vmem %s0, %s376
      %p378 = scmp.lt.s32.totalorder %s22, 1
      %s379 = scalar_select %p378, %s22, 1
      %s380 = smul.addr %s379, 8
      %s381 = scalar_lea.vmem %s11, %s380
      %v382 = vld [vmem:[%s377] sm:$0xff]
      %v383 = vld [vmem:[%s1] sm:$0xff]
      %v384 = vld [vmem:[%s1 + $0x8] sm:$0xff]
      %v385 = vld [vmem:[%s1 + $0x10] sm:$0xff]
      %v386 = vld [vmem:[%s1 + $0x18] sm:$0xff]
      %v387 = vld [vmem:[%s2] sm:$0x1]
      %v389 = vlaneseq
      %v390 = vshrl.u32 %v389, 7
      %v391 = vsub.s32 0, %v390
      %v392 = vrot.slane %v387, %v391
      %vm394 = vcmask 261120
      %v396 = vsel %vm394, %v382, 0
      %398 = vmatprep.subr.mxu0 0.0
      %399 = vmatpush1.msra.mxu0 0.0
      %400 = vmatprep.subr.mxu0 0.0
      %401 = vmatpush1.msra.mxu0 0.0
      %402 = vmatprep.subr.mxu0 0.0
      %403 = vmatpush1.msra.mxu0 0.0
      %404 = vmatprep.subr.mxu0 0.0
      %405 = vmatpush1.msra.mxu0 0.0
      %406 = vmatprep.subr.mxu0 0.0
      %407 = vmatpush1.msra.mxu0 0.0
      %408 = vmatprep.subr.mxu0 0.0
      %409 = vmatpush1.msra.mxu0 0.0
      %410 = vmatprep.subr.mxu0 0.0
      %411 = vmatpush1.msra.mxu0 0.0
      %412 = vmatprep.subr.mxu0 0.0
      %413 = vmatpush1.msra.mxu0 0.0
      %414 = vmatprep.subr.mxu0 0.0
      %415 = vmatpush1.msra.mxu0 0.0
      %416 = vmatprep.subr.mxu0 0.0
      %417 = vmatpush1.msra.mxu0 0.0
      %418 = vmatprep.subr.mxu0 0.0
      %419 = vmatpush1.msra.mxu0 0.0
      %420 = vmatprep.subr.mxu0 0.0
      %421 = vmatpush1.msra.mxu0 0.0
      %422 = vmatprep.subr.mxu0 0.0
      %423 = vmatpush1.msra.mxu0 %v386
      %424 = vmatprep.subr.mxu0 0.0
      %425 = vmatpush1.msra.mxu0 %v385
      %426 = vmatprep.subr.mxu0 0.0
      %427 = vmatpush1.msra.mxu0 %v384
      %428 = vmatprep.subr.mxu0 0.0
      %429 = vmatpush1.msra.mxu0 %v383
      %430 = vmatprep.subr.mxu0 0.0
      %431 = vmatpush2.msra.mxu0 0.0
      %432 = vmatprep.subr.mxu0 0.0
      %433 = vmatpush2.msra.mxu0 0.0
      %434 = vmatprep.subr.mxu0 0.0
      %435 = vmatpush2.msra.mxu0 0.0
      %436 = vmatprep.subr.mxu0 0.0
      %437 = vmatpush2.msra.mxu0 0.0
      %438 = vmatprep.subr.mxu0 0.0
      %439 = vmatpush2.msra.mxu0 0.0
      %440 = vmatprep.subr.mxu0 0.0
      %441 = vmatpush2.msra.mxu0 0.0
      %442 = vmatprep.subr.mxu0 0.0
      %443 = vmatpush2.msra.mxu0 0.0
      %444 = vmatprep.subr.mxu0 0.0
      %445 = vmatpush2.msra.mxu0 0.0
      %446 = vmatprep.subr.mxu0 0.0
      %447 = vmatpush2.msra.mxu0 0.0
      %448 = vmatprep.subr.mxu0 0.0
      %449 = vmatpush2.msra.mxu0 0.0
      %450 = vmatprep.subr.mxu0 0.0
      %451 = vmatpush2.msra.mxu0 0.0
      %452 = vmatprep.subr.mxu0 0.0
      %453 = vmatpush2.msra.mxu0 0.0
      %454 = vmatprep.subr.mxu0 0.0
      %455 = vmatpush2.msra.mxu0 0.0
      %456 = vmatprep.subr.mxu0 0.0
      %457 = vmatpush2.msra.mxu0 0.0
      %458 = vmatprep.subr.mxu0 0.0
      %459 = vmatpush2.msra.mxu0 0.0
      %460 = vmatprep.subr.mxu0 0.0
      %461 = vmatpush2.msra.mxu0 0.0
      %462 = vmatprep.mubr.f32.mxu0 0.0
      %463 = vmatmul.mubr.f32.gmra.mxu0 %v396
      %v464 = vpop.f32.mrf.mxu0
      %v465 = vadd.f32 %v392, %v464
      %v466 = vpop.f32.mrf.mxu0
      %467 = vdwg.mxu0
      %v468 = vmax.f32 %v465, 0.0
      %v469 = vld [vmem:[%s3] sm:$0xff]
      %v470 = vld [vmem:[%s3 + $0x8] sm:$0xff]
      %v471 = vld [vmem:[%s3 + $0x10] sm:$0xff]
      %v472 = vld [vmem:[%s3 + $0x18] sm:$0xff]
      %v473 = vld [vmem:[%s3 + $0x20] sm:$0xff]
      %v474 = vld [vmem:[%s3 + $0x28] sm:$0xff]
      %v475 = vld [vmem:[%s3 + $0x30] sm:$0xff]
      %v476 = vld [vmem:[%s3 + $0x38] sm:$0xff]
      %v477 = vld [vmem:[%s4] sm:$0x1]
      %v479 = vlaneseq
      %v480 = vshrl.u32 %v479, 7
      %v481 = vsub.s32 0, %v480
      %v482 = vrot.slane %v477, %v481
      %vm484 = vcmask 523264
      %v486 = vsel %vm484, %v468, 0
      %488 = vmatprep.subr.mxu0 0.0
      %489 = vmatpush1.msra.mxu0 0.0
      %490 = vmatprep.subr.mxu0 0.0
      %491 = vmatpush1.msra.mxu0 0.0
      %492 = vmatprep.subr.mxu0 0.0
      %493 = vmatpush1.msra.mxu0 0.0
      %494 = vmatprep.subr.mxu0 0.0
      %495 = vmatpush1.msra.mxu0 0.0
      %496 = vmatprep.subr.mxu0 0.0
      %497 = vmatpush1.msra.mxu0 0.0
      %498 = vmatprep.subr.mxu0 0.0
      %499 = vmatpush1.msra.mxu0 0.0
      %500 = vmatprep.subr.mxu0 0.0
      %501 = vmatpush1.msra.mxu0 0.0
      %502 = vmatprep.subr.mxu0 0.0
      %503 = vmatpush1.msra.mxu0 0.0
      %504 = vmatprep.subr.mxu0 0.0
      %505 = vmatpush1.msra.mxu0 %v476
      %506 = vmatprep.subr.mxu0 0.0
      %507 = vmatpush1.msra.mxu0 %v475
      %508 = vmatprep.subr.mxu0 0.0
      %509 = vmatpush1.msra.mxu0 %v474
      %510 = vmatprep.subr.mxu0 0.0
      %511 = vmatpush1.msra.mxu0 %v473
      %512 = vmatprep.subr.mxu0 0.0
      %513 = vmatpush1.msra.mxu0 %v472
      %514 = vmatprep.subr.mxu0 0.0
      %515 = vmatpush1.msra.mxu0 %v471
      %516 = vmatprep.subr.mxu0 0.0
      %517 = vmatpush1.msra.mxu0 %v470
      %518 = vmatprep.subr.mxu0 0.0
      %519 = vmatpush1.msra.mxu0 %v469
      %520 = vmatprep.subr.mxu0 0.0
      %521 = vmatpush2.msra.mxu0 0.0
      %522 = vmatprep.subr.mxu0 0.0
      %523 = vmatpush2.msra.mxu0 0.0
      %524 = vmatprep.subr.mxu0 0.0
      %525 = vmatpush2.msra.mxu0 0.0
      %526 = vmatprep.subr.mxu0 0.0
      %527 = vmatpush2.msra.mxu0 0.0
      %528 = vmatprep.subr.mxu0 0.0
      %529 = vmatpush2.msra.mxu0 0.0
      %530 = vmatprep.subr.mxu0 0.0
      %531 = vmatpush2.msra.mxu0 0.0
      %532 = vmatprep.subr.mxu0 0.0
      %533 = vmatpush2.msra.mxu0 0.0
      %534 = vmatprep.subr.mxu0 0.0
      %535 = vmatpush2.msra.mxu0 0.0
      %536 = vmatprep.subr.mxu0 0.0
      %537 = vmatpush2.msra.mxu0 0.0
      %538 = vmatprep.subr.mxu0 0.0
      %539 = vmatpush2.msra.mxu0 0.0
      %540 = vmatprep.subr.mxu0 0.0
      %541 = vmatpush2.msra.mxu0 0.0
      %542 = vmatprep.subr.mxu0 0.0
      %543 = vmatpush2.msra.mxu0 0.0
      %544 = vmatprep.subr.mxu0 0.0
      %545 = vmatpush2.msra.mxu0 0.0
      %546 = vmatprep.subr.mxu0 0.0
      %547 = vmatpush2.msra.mxu0 0.0
      %548 = vmatprep.subr.mxu0 0.0
      %549 = vmatpush2.msra.mxu0 0.0
      %550 = vmatprep.subr.mxu0 0.0
      %551 = vmatpush2.msra.mxu0 0.0
      %552 = vmatprep.mubr.f32.mxu0 0.0
      %553 = vmatmul.mubr.f32.gmra.mxu0 %v486
      %v554 = vpop.f32.mrf.mxu0
      %v555 = vadd.f32 %v482, %v554
      %v556 = vpop.f32.mrf.mxu0
      %557 = vdwg.mxu0
      %v558 = vadd.f32 %v555, %v382
      %v559 = vmax.f32 %v558, 0.0
      %v560 = vld [vmem:[%s5] sm:$0xff]
      %v561 = vld [vmem:[%s5 + $0x8] sm:$0xff]
      %v562 = vld [vmem:[%s5 + $0x10] sm:$0xff]
      %v563 = vld [vmem:[%s5 + $0x18] sm:$0xff]
      %v564 = vld [vmem:[%s6] sm:$0x1]
      %v566 = vlaneseq
      %v567 = vshrl.u32 %v566, 7
      %v568 = vsub.s32 0, %v567
      %v569 = vrot.slane %v564, %v568
      %v572 = vsel %vm394, %v559, 0
      %574 = vmatprep.subr.mxu0 0.0
      %575 = vmatpush1.msra.mxu0 0.0
      %576 = vmatprep.subr.mxu0 0.0
      %577 = vmatpush1.msra.mxu0 0.0
      %578 = vmatprep.subr.mxu0 0.0
      %579 = vmatpush1.msra.mxu0 0.0
      %580 = vmatprep.subr.mxu0 0.0
      %581 = vmatpush1.msra.mxu0 0.0
      %582 = vmatprep.subr.mxu0 0.0
      %583 = vmatpush1.msra.mxu0 0.0
      %584 = vmatprep.subr.mxu0 0.0
      %585 = vmatpush1.msra.mxu0 0.0
      %586 = vmatprep.subr.mxu0 0.0
      %587 = vmatpush1.msra.mxu0 0.0
      %588 = vmatprep.subr.mxu0 0.0
      %589 = vmatpush1.msra.mxu0 0.0
      %590 = vmatprep.subr.mxu0 0.0
      %591 = vmatpush1.msra.mxu0 0.0
      %592 = vmatprep.subr.mxu0 0.0
      %593 = vmatpush1.msra.mxu0 0.0
      %594 = vmatprep.subr.mxu0 0.0
      %595 = vmatpush1.msra.mxu0 0.0
      %596 = vmatprep.subr.mxu0 0.0
      %597 = vmatpush1.msra.mxu0 0.0
      %598 = vmatprep.subr.mxu0 0.0
      %599 = vmatpush1.msra.mxu0 %v563
      %600 = vmatprep.subr.mxu0 0.0
      %601 = vmatpush1.msra.mxu0 %v562
      %602 = vmatprep.subr.mxu0 0.0
      %603 = vmatpush1.msra.mxu0 %v561
      %604 = vmatprep.subr.mxu0 0.0
      %605 = vmatpush1.msra.mxu0 %v560
      %606 = vmatprep.subr.mxu0 0.0
      %607 = vmatpush2.msra.mxu0 0.0
      %608 = vmatprep.subr.mxu0 0.0
      %609 = vmatpush2.msra.mxu0 0.0
      %610 = vmatprep.subr.mxu0 0.0
      %611 = vmatpush2.msra.mxu0 0.0
      %612 = vmatprep.subr.mxu0 0.0
      %613 = vmatpush2.msra.mxu0 0.0
      %614 = vmatprep.subr.mxu0 0.0
      %615 = vmatpush2.msra.mxu0 0.0
      %616 = vmatprep.subr.mxu0 0.0
      %617 = vmatpush2.msra.mxu0 0.0
      %618 = vmatprep.subr.mxu0 0.0
      %619 = vmatpush2.msra.mxu0 0.0
      %620 = vmatprep.subr.mxu0 0.0
      %621 = vmatpush2.msra.mxu0 0.0
      %622 = vmatprep.subr.mxu0 0.0
      %623 = vmatpush2.msra.mxu0 0.0
      %624 = vmatprep.subr.mxu0 0.0
      %625 = vmatpush2.msra.mxu0 0.0
      %626 = vmatprep.subr.mxu0 0.0
      %627 = vmatpush2.msra.mxu0 0.0
      %628 = vmatprep.subr.mxu0 0.0
      %629 = vmatpush2.msra.mxu0 0.0
      %630 = vmatprep.subr.mxu0 0.0
      %631 = vmatpush2.msra.mxu0 0.0
      %632 = vmatprep.subr.mxu0 0.0
      %633 = vmatpush2.msra.mxu0 0.0
      %634 = vmatprep.subr.mxu0 0.0
      %635 = vmatpush2.msra.mxu0 0.0
      %636 = vmatprep.subr.mxu0 0.0
      %637 = vmatpush2.msra.mxu0 0.0
      %638 = vmatprep.mubr.f32.mxu0 0.0
      %639 = vmatmul.mubr.f32.gmra.mxu0 %v572
      %v640 = vpop.f32.mrf.mxu0
      %v641 = vadd.f32 %v569, %v640
      %v642 = vpop.f32.mrf.mxu0
      %643 = vdwg.mxu0
      %v644 = vmax.f32 %v641, 0.0
      %v645 = vld [vmem:[%s7] sm:$0xff]
      %v646 = vld [vmem:[%s7 + $0x8] sm:$0xff]
      %v647 = vld [vmem:[%s7 + $0x10] sm:$0xff]
      %v648 = vld [vmem:[%s7 + $0x18] sm:$0xff]
      %v649 = vld [vmem:[%s7 + $0x20] sm:$0xff]
      %v650 = vld [vmem:[%s7 + $0x28] sm:$0xff]
      %v651 = vld [vmem:[%s7 + $0x30] sm:$0xff]
      %v652 = vld [vmem:[%s7 + $0x38] sm:$0xff]
      %v653 = vld [vmem:[%s8] sm:$0x1]
      %v655 = vlaneseq
      %v656 = vshrl.u32 %v655, 7
      %v657 = vsub.s32 0, %v656
      %v658 = vrot.slane %v653, %v657
      %v661 = vsel %vm484, %v644, 0
      %663 = vmatprep.subr.mxu0 0.0
      %664 = vmatpush1.msra.mxu0 0.0
      %665 = vmatprep.subr.mxu0 0.0
      %666 = vmatpush1.msra.mxu0 0.0
      %667 = vmatprep.subr.mxu0 0.0
      %668 = vmatpush1.msra.mxu0 0.0
      %669 = vmatprep.subr.mxu0 0.0
      %670 = vmatpush1.msra.mxu0 0.0
      %671 = vmatprep.subr.mxu0 0.0
      %672 = vmatpush1.msra.mxu0 0.0
      %673 = vmatprep.subr.mxu0 0.0
      %674 = vmatpush1.msra.mxu0 0.0
      %675 = vmatprep.subr.mxu0 0.0
      %676 = vmatpush1.msra.mxu0 0.0
      %677 = vmatprep.subr.mxu0 0.0
      %678 = vmatpush1.msra.mxu0 0.0
      %679 = vmatprep.subr.mxu0 0.0
      %680 = vmatpush1.msra.mxu0 %v652
      %681 = vmatprep.subr.mxu0 0.0
      %682 = vmatpush1.msra.mxu0 %v651
      %683 = vmatprep.subr.mxu0 0.0
      %684 = vmatpush1.msra.mxu0 %v650
      %685 = vmatprep.subr.mxu0 0.0
      %686 = vmatpush1.msra.mxu0 %v649
      %687 = vmatprep.subr.mxu0 0.0
      %688 = vmatpush1.msra.mxu0 %v648
      %689 = vmatprep.subr.mxu0 0.0
      %690 = vmatpush1.msra.mxu0 %v647
      %691 = vmatprep.subr.mxu0 0.0
      %692 = vmatpush1.msra.mxu0 %v646
      %693 = vmatprep.subr.mxu0 0.0
      %694 = vmatpush1.msra.mxu0 %v645
      %695 = vmatprep.subr.mxu0 0.0
      %696 = vmatpush2.msra.mxu0 0.0
      %697 = vmatprep.subr.mxu0 0.0
      %698 = vmatpush2.msra.mxu0 0.0
      %699 = vmatprep.subr.mxu0 0.0
      %700 = vmatpush2.msra.mxu0 0.0
      %701 = vmatprep.subr.mxu0 0.0
      %702 = vmatpush2.msra.mxu0 0.0
      %703 = vmatprep.subr.mxu0 0.0
      %704 = vmatpush2.msra.mxu0 0.0
      %705 = vmatprep.subr.mxu0 0.0
      %706 = vmatpush2.msra.mxu0 0.0
      %707 = vmatprep.subr.mxu0 0.0
      %708 = vmatpush2.msra.mxu0 0.0
      %709 = vmatprep.subr.mxu0 0.0
      %710 = vmatpush2.msra.mxu0 0.0
      %711 = vmatprep.subr.mxu0 0.0
      %712 = vmatpush2.msra.mxu0 0.0
      %713 = vmatprep.subr.mxu0 0.0
      %714 = vmatpush2.msra.mxu0 0.0
      %715 = vmatprep.subr.mxu0 0.0
      %716 = vmatpush2.msra.mxu0 0.0
      %717 = vmatprep.subr.mxu0 0.0
      %718 = vmatpush2.msra.mxu0 0.0
      %719 = vmatprep.subr.mxu0 0.0
      %720 = vmatpush2.msra.mxu0 0.0
      %721 = vmatprep.subr.mxu0 0.0
      %722 = vmatpush2.msra.mxu0 0.0
      %723 = vmatprep.subr.mxu0 0.0
      %724 = vmatpush2.msra.mxu0 0.0
      %725 = vmatprep.subr.mxu0 0.0
      %726 = vmatpush2.msra.mxu0 0.0
      %727 = vmatprep.mubr.f32.mxu0 0.0
      %728 = vmatmul.mubr.f32.gmra.mxu0 %v661
      %v729 = vpop.f32.mrf.mxu0
      %v730 = vadd.f32 %v658, %v729
      %v731 = vpop.f32.mrf.mxu0
      %732 = vdwg.mxu0
      %v733 = vadd.f32 %v730, %v559
      %v734 = vmax.f32 %v733, 0.0
      %v735 = vld [vmem:[%s9] sm:$0xff]
      %v736 = vld [vmem:[%s9 + $0x8] sm:$0xff]
      %v737 = vld [vmem:[%s9 + $0x10] sm:$0xff]
      %v738 = vld [vmem:[%s9 + $0x18] sm:$0xff]
      %v739 = vld [vmem:[%s10] sm:$0x1]
      %v741 = vlaneseq
      %v742 = vshrl.u32 %v741, 7
      %v743 = vsub.s32 0, %v742
      %v744 = vrot.slane %v739, %v743
      %v747 = vsel %vm394, %v734, 0
      %749 = vmatprep.subr.mxu0 0.0
      %750 = vmatpush1.msra.mxu0 0.0
      %751 = vmatprep.subr.mxu0 0.0
      %752 = vmatpush1.msra.mxu0 0.0
      %753 = vmatprep.subr.mxu0 0.0
      %754 = vmatpush1.msra.mxu0 0.0
      %755 = vmatprep.subr.mxu0 0.0
      %756 = vmatpush1.msra.mxu0 0.0
      %757 = vmatprep.subr.mxu0 0.0
      %758 = vmatpush1.msra.mxu0 0.0
      %759 = vmatprep.subr.mxu0 0.0
      %760 = vmatpush1.msra.mxu0 0.0
      %761 = vmatprep.subr.mxu0 0.0
      %762 = vmatpush1.msra.mxu0 0.0
      %763 = vmatprep.subr.mxu0 0.0
      %764 = vmatpush1.msra.mxu0 0.0
      %765 = vmatprep.subr.mxu0 0.0
      %766 = vmatpush1.msra.mxu0 0.0
      %767 = vmatprep.subr.mxu0 0.0
      %768 = vmatpush1.msra.mxu0 0.0
      %769 = vmatprep.subr.mxu0 0.0
      %770 = vmatpush1.msra.mxu0 0.0
      %771 = vmatprep.subr.mxu0 0.0
      %772 = vmatpush1.msra.mxu0 0.0
      %773 = vmatprep.subr.mxu0 0.0
      %774 = vmatpush1.msra.mxu0 %v738
      %775 = vmatprep.subr.mxu0 0.0
      %776 = vmatpush1.msra.mxu0 %v737
      %777 = vmatprep.subr.mxu0 0.0
      %778 = vmatpush1.msra.mxu0 %v736
      %779 = vmatprep.subr.mxu0 0.0
      %780 = vmatpush1.msra.mxu0 %v735
      %781 = vmatprep.subr.mxu0 0.0
      %782 = vmatpush2.msra.mxu0 0.0
      %783 = vmatprep.subr.mxu0 0.0
      %784 = vmatpush2.msra.mxu0 0.0
      %785 = vmatprep.subr.mxu0 0.0
      %786 = vmatpush2.msra.mxu0 0.0
      %787 = vmatprep.subr.mxu0 0.0
      %788 = vmatpush2.msra.mxu0 0.0
      %789 = vmatprep.subr.mxu0 0.0
      %790 = vmatpush2.msra.mxu0 0.0
      %791 = vmatprep.subr.mxu0 0.0
      %792 = vmatpush2.msra.mxu0 0.0
      %793 = vmatprep.subr.mxu0 0.0
      %794 = vmatpush2.msra.mxu0 0.0
      %795 = vmatprep.subr.mxu0 0.0
      %796 = vmatpush2.msra.mxu0 0.0
      %797 = vmatprep.subr.mxu0 0.0
      %798 = vmatpush2.msra.mxu0 0.0
      %799 = vmatprep.subr.mxu0 0.0
      %800 = vmatpush2.msra.mxu0 0.0
      %801 = vmatprep.subr.mxu0 0.0
      %802 = vmatpush2.msra.mxu0 0.0
      %803 = vmatprep.subr.mxu0 0.0
      %804 = vmatpush2.msra.mxu0 0.0
      %805 = vmatprep.subr.mxu0 0.0
      %806 = vmatpush2.msra.mxu0 0.0
      %807 = vmatprep.subr.mxu0 0.0
      %808 = vmatpush2.msra.mxu0 0.0
      %809 = vmatprep.subr.mxu0 0.0
      %810 = vmatpush2.msra.mxu0 0.0
      %811 = vmatprep.subr.mxu0 0.0
      %812 = vmatpush2.msra.mxu0 0.0
      %813 = vmatprep.mubr.f32.mxu0 0.0
      %814 = vmatmul.mubr.f32.gmra.mxu0 %v747
      %v815 = vpop.f32.mrf.mxu0
      %v816 = vadd.f32 %v744, %v815
      %v817 = vpop.f32.mrf.mxu0
      %818 = vdwg.mxu0
      %vm819 = vcmask 15360
      %820 = vst.msk [vmem:[%s381] sm:$0xff] %vm819, %v816
      %p821 = scmp.lt.s32.totalorder %s22, 1
      %s822 = scalar_select %p821, %s22, 1
      %s823 = smul.addr %s822, 8
      %s824 = scalar_lea.vmem %s11, %s823
      // Predicated region
      $region65: #{tpu_custom_call.1} parent=63 // pred_check
        %p825 = pneg %p276
      $region66: #{tpu_custom_call.1} parent=63 // pred_check_branch
        %827 = sbr.rel (%p825) target = $region68
      $region67: #{tpu_custom_call.1} parent=63 // pred_region
        _
      $region68: #{tpu_custom_call.1} parent=63 // pred_fallthru
        _
    $region64: #{tpu_custom_call.1} parent=5 // pred_fallthru
      _
    %p828 = scmp.le.s32.totalorder 2, %s17
    // Predicated region
    $region69: #{tpu_custom_call.1} parent=5 // pred_check
      %p829 = pneg %p828
    $region70: #{tpu_custom_call.1} parent=5 // pred_check_branch
      %831 = sbr.rel (%p829) target = $region72
    $region71: #{tpu_custom_call.1} parent=5 // pred_region
      %s832 = ssub.s32 %s17, 2
      // Predicated region
      $region73: #{tpu_custom_call.1} parent=71 // pred_check
        %p833 = pneg %p282
      $region74: #{tpu_custom_call.1} parent=71 // pred_check_branch
        %835 = sbr.rel (%p833) target = $region76
      $region75: #{tpu_custom_call.1} parent=71 // pred_region
        %p836 = scmp.lt.s32.totalorder %s23, 1
        %s837 = scalar_select %p836, %s23, 1
        %s838 = smul.addr %s837, 8
        %s839 = scalar_lea.vmem %s11, %s838
      $region76: #{tpu_custom_call.1} parent=71 // pred_fallthru
        _
    $region72: #{tpu_custom_call.1} parent=5 // pred_fallthru
      _
  $region6: #{tpu_custom_call.1} parent=0 // loop_footer
    %s21 = sadd.s32 1, %s17
  $region7: #{tpu_custom_call.1} parent=0 // loop_footer_branch
    %16 = sbr.rel target = $region3
  $region8: #{tpu_custom_call.1} parent=0 // loop_exit
    _

</llo_original>
